<compile_context>
chip_gen: v6e
topology: v6e:2x2x1
jax: 0.10.0
libtpu: 0.0.40
codegen_flags: <defaults>
</compile_context>

<pallas_src>
import numpy as np
import jax
import jax.numpy as jnp
from jax.experimental import pallas as pl
from jax.experimental.pallas import tpu as pltpu


def _vmem_spec():
    # whole array resident in VMEM, no grid, no pipelining
    return pl.BlockSpec(memory_space=pltpu.MemorySpace.VMEM)


# ---------------------------------------------------------------------------
# Single fused kernel
# ---------------------------------------------------------------------------
def fused_hypernet_kernel(
    x_ref, data_ref, s_ref,
    w1, b1, w2, b2, w34, b34,
    a1, p1, a2, p2,
    out_ref,
):
    f32 = jnp.float32
    bf16 = jnp.bfloat16

    # --- hypernetwork MLP: 784 -> 128 -> ReLU -> 64 -> ReLU -> (64x64 folded into) -> 320
    h = jnp.dot(x_ref[...], w1[...], preferred_element_type=f32) + b1[...]
    h = jnp.maximum(h, 0.0)
    h = jnp.dot(h.astype(bf16), w2[...], preferred_element_type=f32) + b2[...]
    h = jnp.maximum(h, 0.0)
    # w34/b34 fold layers 3 and 4 of the hypernet (no ReLU between them -> exact)
    flat = jnp.dot(h.astype(bf16), w34[...], preferred_element_type=f32) + b34[...]   # (1, 320)
    flat_bf = flat.astype(bf16)

    # --- unpack flat weights into augmented target matrices via exact one-hot matmuls.
    #     w1_aug: rows 0..fi1-1 = W1 (in,out), row fi1 = b1; extra column (all zero here)
    #     carries the "ones" feature through layer 1 after the constant 1 is added below.
    w1_aug = jnp.dot(a1[...] * flat_bf, p1[...], preferred_element_type=f32)   # (fi1+1, fo1+1)
    r = jax.lax.broadcasted_iota(jnp.int32, w1_aug.shape, 0)
    c = jax.lax.broadcasted_iota(jnp.int32, w1_aug.shape, 1)
    w1_aug = w1_aug + jnp.where(
        (r == w1_aug.shape[0] - 1) & (c == w1_aug.shape[1] - 1), 1.0, 0.0)
    w2_aug = jnp.dot(a2[...] * flat_bf, p2[...], preferred_element_type=f32)   # (fi2+1, fo2)

    # --- boolean column gather folded into the MXU:  data[:, mask.bool()] == data @ S
    #     S has an all-zero extra column; adding ones_col appends the bias "ones" feature.
    md = jnp.dot(data_ref[...].astype(bf16), s_ref[...], preferred_element_type=f32)  # (B, fi1+1)
    ones_col = (jax.lax.broadcasted_iota(jnp.int32, md.shape, 1)
                == md.shape[1] - 1).astype(f32)
    md = md + ones_col

    # --- target (inserted) net: Linear+ReLU, then linear head (biases ride in the
    #     augmented rows; the ones feature survives ReLU since relu(1) == 1).
    t = jnp.maximum(
        jnp.dot(md.astype(bf16), w1_aug.astype(bf16), preferred_element_type=f32), 0.0)  # (B, fo1+1)
    out_ref[...] = jnp.dot(t.astype(bf16), w2_aug.astype(bf16),
                           preferred_element_type=f32)                                   # (B, fo2)


# ---------------------------------------------------------------------------
# Host-side parameter preparation (done once, outside the hot path)
# ---------------------------------------------------------------------------
def build_unpack_constants(target_arch, out_size):
    """0/1 matrices so that (A * flat) @ P exactly reproduces each (in+1, out)-augmented
    target matrix (last row = bias) from the flat torch-layout weight vector."""
    (fi1, fo1), (fi2, fo2) = target_arch
    a1 = np.zeros((fi1 + 1, out_size), np.float32)
    p1 = np.zeros((out_size, fo1 + 1), np.float32)   # extra zero column for the ones feature
    a2 = np.zeros((fi2 + 1, out_size), np.float32)
    p2 = np.zeros((out_size, fo2), np.float32)

    off = 0
    for o in range(fo1):                      # layer 1 weights: flat[off + o*fi1 + i] -> W[i, o]
        for i in range(fi1):
            a1[i, off + o * fi1 + i] = 1.0
            p1[off + o * fi1 + i, o] = 1.0
    off += fi1 * fo1
    for o in range(fo1):                      # layer 1 bias -> augmented row fi1
        a1[fi1, off + o] = 1.0
        p1[off + o, o] = 1.0
    off += fo1
    for o in range(fo2):                      # layer 2 weights
        for i in range(fi2):
            a2[i, off + o * fi2 + i] = 1.0
            p2[off + o * fi2 + i, o] = 1.0
    off += fi2 * fo2
    for o in range(fo2):                      # layer 2 bias -> augmented row fi2
        a2[fi2, off + o] = 1.0
        p2[off + o, o] = 1.0
    return a1, p1, a2, p2


def prepare_params(hyper_params, target_arch):
    """hyper_params: list of 4 (W (in,out) f32, b (1,out) f32) pairs for the hypernet MLP.
    Folds layer 3 into the output layer and returns a kernel-ready pytree:
    bf16 weights / 0-1 constants, f32 biases."""
    (w1, b1), (w2, b2), (w3, b3), (w4, b4) = [
        (np.asarray(w, np.float32), np.asarray(b, np.float32)) for w, b in hyper_params]
    out_size = w4.shape[1]
    w34 = w3 @ w4                 # exact fold: no ReLU between the Sequential tail and output_layer
    b34 = b3 @ w4 + b4
    a1, p1, a2, p2 = build_unpack_constants(target_arch, out_size)
    bf = lambda m: jnp.asarray(m, jnp.bfloat16)
    f3 = lambda m: jnp.asarray(m, jnp.float32)
    return dict(
        w1=bf(w1), b1=f3(b1), w2=bf(w2), b2=f3(b2),
        w34=bf(w34), b34=f3(b34),
        a1=bf(a1), p1=bf(p1), a2=bf(a2), p2=bf(p2),
    )


# ---------------------------------------------------------------------------
# Forward pass: one pallas_call, minimal host glue (cumsum-based selection matrix,
# built in the same jit / same executable as the kernel launch)
# ---------------------------------------------------------------------------
def _forward(data, mask, params):
    mask_row = mask[0]
    x = mask_row[None, :].astype(jnp.bfloat16)        # hypernet input (1, 784) in bf16
    fi1 = params["a1"].shape[0] - 1                   # target layer-1 fan-in (20)

    # S[c, j] = 1 iff column c is the j-th selected column (ascending); extra all-zero
    # column fi1 carries the "ones" bias feature added in-kernel. Extra ones beyond fi1
    # are silently dropped (matches the fixed-width target net).
    csum = jnp.cumsum(mask_row) - 1.0
    j = jnp.arange(fi1 + 1, dtype=csum.dtype)
    sel = ((mask_row[:, None] > 0.5)
           & (csum[:, None] == j[None, :])
           & (j[None, :] < fi1)).astype(jnp.bfloat16)     # (784, fi1+1)

    n_out = params["p2"].shape[1]
    args = (x, data, sel,
            params["w1"], params["b1"], params["w2"], params["b2"],
            params["w34"], params["b34"],
            params["a1"], params["p1"], params["a2"], params["p2"])
    return pl.pallas_call(
        fused_hypernet_kernel,
        out_shape=jax.ShapeDtypeStruct((data.shape[0], n_out), jnp.float32),
        in_specs=[_vmem_spec() for _ in args],
        out_specs=_vmem_spec(),
    )(*args)


hypernet_forward_slow_step = jax.jit(_forward)


# ---------------------------------------------------------------------------
# Pure-f32 reference (torch-style reshape/transpose + boolean gather) for sanity checking.
# TODO(synk): InsertableNet source is not provided; flat layout assumed to be per-layer
#             torch (out,in) row-major weights followed by bias, ReLU on hidden, linear head.
# ---------------------------------------------------------------------------
def reference_forward(data, mask, raw_params, target_arch):
    (w1, b1), (w2, b2), (w3, b3), (w4, b4) = raw_params
    h = jnp.maximum(mask[:1] @ w1 + b1, 0.0)
    h = jnp.maximum(h @ w2 + b2, 0.0)
    h = h @ w3 + b3
    flat = (h @ w4 + b4)[0]

    layers, start = [], 0
    for fin, fout in target_arch:
        w = flat[start:start + fin * fout].reshape(fout, fin); start += fin * fout
        b = flat[start:start + fout]; start += fout
        layers.append((w.T, b))

    sel_idx = np.nonzero(np.asarray(mask[0]) > 0.5)[0][: target_arch[0][0]]
    md = data[:, sel_idx]
    t = jnp.maximum(md @ layers[0][0] + layers[0][1], 0.0)
    return t @ layers[1][0] + layers[1][1]


# ---------------------------------------------------------------------------
# Deterministic example inputs
# ---------------------------------------------------------------------------
def linear_params(key, fan_in, fan_out):
    kw, kb = jax.random.split(key)
    bound = 1.0 / np.sqrt(np.float32(fan_in))
    w = jax.random.uniform(kw, (fan_in, fan_out), jnp.float32, -bound, bound)
    b = jax.random.uniform(kb, (1, fan_out), jnp.float32, -bound, bound)
    return w, b


if __name__ == "__main__":
    INPUT_SIZE = 784                      # first Linear of the default hypernet architecture
    TARGET_ARCH = [(20, 10), (10, 10)]    # target_architecture default
    MASK_SIZE = TARGET_ARCH[0][0]         # 20
    OUT_SIZE = sum(i * o + o for i, o in TARGET_ARCH)   # 320
    B = 8                                 # small batch

    key = jax.random.PRNGKey(0)
    keys = jax.random.split(key, 6)

    # hypernet MLP:  784 -> 128 -> 64 -> 64 -> 320
    hyper_dims = [(INPUT_SIZE, 128), (128, 64), (64, 64), (64, OUT_SIZE)]
    raw_params = [linear_params(keys[i], fi, fo) for i, (fi, fo) in enumerate(hyper_dims)]
    params = prepare_params(raw_params, TARGET_ARCH)

    # data: (B, 784)
    data = jax.random.normal(keys[4], (B, INPUT_SIZE), jnp.float32)

    # mask: (B, 784) float32 with exactly MASK_SIZE ones per row (random, no replacement)
    scores = jax.random.uniform(keys[5], (B, INPUT_SIZE))
    idx = jnp.argsort(scores, axis=-1)[:, :MASK_SIZE]
    mask = jax.vmap(lambda ii: jnp.zeros((INPUT_SIZE,), jnp.float32).at[ii].set(1.0))(idx)

    out = hypernet_forward_slow_step(data, mask, params)
    out = jax.block_until_ready(out)

    ref = reference_forward(data, mask, raw_params, TARGET_ARCH)
    assert out.shape == (B, TARGET_ARCH[-1][-1])
    assert jnp.all(jnp.isfinite(out))
    max_err = float(jnp.max(jnp.abs(out - ref)))
    assert jnp.allclose(out, ref, atol=3e-2, rtol=3e-2), max_err
    print("KERNEL_OK")
</pallas_src>

<mosaic_0001>
module attributes {stable_mosaic.version = 11 : i64} {
  func.func @fused_hypernet_kernel(%arg0: memref<1x784xbf16, #tpu.memory_space<vmem>>, %arg1: memref<8x784xf32, #tpu.memory_space<vmem>>, %arg2: memref<784x21xbf16, #tpu.memory_space<vmem>>, %arg3: memref<784x128xbf16, #tpu.memory_space<vmem>>, %arg4: memref<1x128xf32, #tpu.memory_space<vmem>>, %arg5: memref<128x64xbf16, #tpu.memory_space<vmem>>, %arg6: memref<1x64xf32, #tpu.memory_space<vmem>>, %arg7: memref<64x320xbf16, #tpu.memory_space<vmem>>, %arg8: memref<1x320xf32, #tpu.memory_space<vmem>>, %arg9: memref<21x320xbf16, #tpu.memory_space<vmem>>, %arg10: memref<320x11xbf16, #tpu.memory_space<vmem>>, %arg11: memref<11x320xbf16, #tpu.memory_space<vmem>>, %arg12: memref<320x10xbf16, #tpu.memory_space<vmem>>, %arg13: memref<8x10xf32, #tpu.memory_space<vmem>>) attributes {dimension_semantics = [], scalar_prefetch = 0 : i64, scratch_operands = 0 : i64, tpu.core_type = #tpu.core_type<tc>} {
    %c0 = arith.constant 0 : index
    %c0_0 = arith.constant 0 : index
    %0 = vector.load %arg0[%c0, %c0_0] : memref<1x784xbf16, #tpu.memory_space<vmem>>, vector<1x784xbf16>
    %c0_1 = arith.constant 0 : index
    %c0_2 = arith.constant 0 : index
    %1 = vector.load %arg3[%c0_1, %c0_2] : memref<784x128xbf16, #tpu.memory_space<vmem>>, vector<784x128xbf16>
    %cst = arith.constant dense<0.000000e+00> : vector<1x128xf32>
    %2 = tpu.matmul %0, %1, %cst {dimension_numbers = #tpu.dot_dimension_numbers<[1], [0], [0], [1], [0, 0, 1, 1], [], []>} : vector<1x784xbf16>, vector<784x128xbf16>, vector<1x128xf32> -> vector<1x128xf32>
    %c0_3 = arith.constant 0 : index
    %c0_4 = arith.constant 0 : index
    %3 = vector.load %arg4[%c0_3, %c0_4] : memref<1x128xf32, #tpu.memory_space<vmem>>, vector<1x128xf32>
    %4 = arith.addf %2, %3 : vector<1x128xf32>
    %cst_5 = arith.constant 0.000000e+00 : f32
    %5 = vector.broadcast %cst_5 : f32 to vector<1x128xf32>
    %6 = arith.maximumf %4, %5 : vector<1x128xf32>
    %7 = arith.truncf %6 : vector<1x128xf32> to vector<1x128xbf16>
    %c0_6 = arith.constant 0 : index
    %c0_7 = arith.constant 0 : index
    %8 = vector.load %arg5[%c0_6, %c0_7] : memref<128x64xbf16, #tpu.memory_space<vmem>>, vector<128x64xbf16>
    %cst_8 = arith.constant dense<0.000000e+00> : vector<1x64xf32>
    %9 = tpu.matmul %7, %8, %cst_8 {dimension_numbers = #tpu.dot_dimension_numbers<[1], [0], [0], [1], [0, 0, 1, 1], [], []>} : vector<1x128xbf16>, vector<128x64xbf16>, vector<1x64xf32> -> vector<1x64xf32>
    %c0_9 = arith.constant 0 : index
    %c0_10 = arith.constant 0 : index
    %10 = vector.load %arg6[%c0_9, %c0_10] : memref<1x64xf32, #tpu.memory_space<vmem>>, vector<1x64xf32>
    %11 = arith.addf %9, %10 : vector<1x64xf32>
    %cst_11 = arith.constant 0.000000e+00 : f32
    %12 = vector.broadcast %cst_11 : f32 to vector<1x64xf32>
    %13 = arith.maximumf %11, %12 : vector<1x64xf32>
    %14 = arith.truncf %13 : vector<1x64xf32> to vector<1x64xbf16>
    %c0_12 = arith.constant 0 : index
    %c0_13 = arith.constant 0 : index
    %15 = vector.load %arg7[%c0_12, %c0_13] : memref<64x320xbf16, #tpu.memory_space<vmem>>, vector<64x320xbf16>
    %cst_14 = arith.constant dense<0.000000e+00> : vector<1x320xf32>
    %16 = tpu.matmul %14, %15, %cst_14 {dimension_numbers = #tpu.dot_dimension_numbers<[1], [0], [0], [1], [0, 0, 1, 1], [], []>} : vector<1x64xbf16>, vector<64x320xbf16>, vector<1x320xf32> -> vector<1x320xf32>
    %c0_15 = arith.constant 0 : index
    %c0_16 = arith.constant 0 : index
    %17 = vector.load %arg8[%c0_15, %c0_16] : memref<1x320xf32, #tpu.memory_space<vmem>>, vector<1x320xf32>
    %18 = arith.addf %16, %17 : vector<1x320xf32>
    %19 = arith.truncf %18 : vector<1x320xf32> to vector<1x320xbf16>
    %c0_17 = arith.constant 0 : index
    %c0_18 = arith.constant 0 : index
    %20 = vector.load %arg9[%c0_17, %c0_18] : memref<21x320xbf16, #tpu.memory_space<vmem>>, vector<21x320xbf16>
    %21 = vector.broadcast %19 : vector<1x320xbf16> to vector<21x320xbf16>
    %22 = arith.mulf %20, %21 : vector<21x320xbf16>
    %c0_19 = arith.constant 0 : index
    %c0_20 = arith.constant 0 : index
    %23 = vector.load %arg10[%c0_19, %c0_20] : memref<320x11xbf16, #tpu.memory_space<vmem>>, vector<320x11xbf16>
    %cst_21 = arith.constant dense<0.000000e+00> : vector<21x11xf32>
    %24 = tpu.matmul %22, %23, %cst_21 {dimension_numbers = #tpu.dot_dimension_numbers<[1], [0], [0], [1], [0, 0, 1, 1], [], []>} : vector<21x320xbf16>, vector<320x11xbf16>, vector<21x11xf32> -> vector<21x11xf32>
    %25 = tpu.iota {dimensions = array<i32: 0>} : vector<21x11xi32>
    %26 = tpu.iota {dimensions = array<i32: 1>} : vector<21x11xi32>
    %c20_i32 = arith.constant 20 : i32
    %27 = vector.broadcast %c20_i32 : i32 to vector<21x11xi32>
    %28 = arith.cmpi eq, %25, %27 : vector<21x11xi32>
    %c10_i32 = arith.constant 10 : i32
    %29 = vector.broadcast %c10_i32 : i32 to vector<21x11xi32>
    %30 = arith.cmpi eq, %26, %29 : vector<21x11xi32>
    %31 = arith.andi %28, %30 : vector<21x11xi1>
    %cst_22 = arith.constant 1.000000e+00 : f32
    %cst_23 = arith.constant 0.000000e+00 : f32
    %32 = vector.broadcast %cst_22 : f32 to vector<21x11xf32>
    %33 = vector.broadcast %cst_23 : f32 to vector<21x11xf32>
    %34 = arith.select %31, %32, %33 : vector<21x11xi1>, vector<21x11xf32>
    %35 = arith.addf %24, %34 : vector<21x11xf32>
    %c0_24 = arith.constant 0 : index
    %c0_25 = arith.constant 0 : index
    %36 = vector.load %arg11[%c0_24, %c0_25] : memref<11x320xbf16, #tpu.memory_space<vmem>>, vector<11x320xbf16>
    %37 = vector.broadcast %19 : vector<1x320xbf16> to vector<11x320xbf16>
    %38 = arith.mulf %36, %37 : vector<11x320xbf16>
    %c0_26 = arith.constant 0 : index
    %c0_27 = arith.constant 0 : index
    %39 = vector.load %arg12[%c0_26, %c0_27] : memref<320x10xbf16, #tpu.memory_space<vmem>>, vector<320x10xbf16>
    %cst_28 = arith.constant dense<0.000000e+00> : vector<11x10xf32>
    %40 = tpu.matmul %38, %39, %cst_28 {dimension_numbers = #tpu.dot_dimension_numbers<[1], [0], [0], [1], [0, 0, 1, 1], [], []>} : vector<11x320xbf16>, vector<320x10xbf16>, vector<11x10xf32> -> vector<11x10xf32>
    %c0_29 = arith.constant 0 : index
    %c0_30 = arith.constant 0 : index
    %41 = vector.load %arg1[%c0_29, %c0_30] : memref<8x784xf32, #tpu.memory_space<vmem>>, vector<8x784xf32>
    %42 = arith.truncf %41 : vector<8x784xf32> to vector<8x784xbf16>
    %c0_31 = arith.constant 0 : index
    %c0_32 = arith.constant 0 : index
    %43 = vector.load %arg2[%c0_31, %c0_32] : memref<784x21xbf16, #tpu.memory_space<vmem>>, vector<784x21xbf16>
    %cst_33 = arith.constant dense<0.000000e+00> : vector<8x21xf32>
    %44 = tpu.matmul %42, %43, %cst_33 {dimension_numbers = #tpu.dot_dimension_numbers<[1], [0], [0], [1], [0, 0, 1, 1], [], []>} : vector<8x784xbf16>, vector<784x21xbf16>, vector<8x21xf32> -> vector<8x21xf32>
    %45 = tpu.iota {dimensions = array<i32: 1>} : vector<8x21xi32>
    %c20_i32_34 = arith.constant 20 : i32
    %46 = vector.broadcast %c20_i32_34 : i32 to vector<8x21xi32>
    %47 = arith.cmpi eq, %45, %46 : vector<8x21xi32>
    %48 = arith.extui %47 : vector<8x21xi1> to vector<8x21xi32>
    %49 = arith.sitofp %48 : vector<8x21xi32> to vector<8x21xf32>
    %50 = arith.addf %44, %49 : vector<8x21xf32>
    %51 = arith.truncf %50 : vector<8x21xf32> to vector<8x21xbf16>
    %52 = arith.truncf %35 : vector<21x11xf32> to vector<21x11xbf16>
    %cst_35 = arith.constant dense<0.000000e+00> : vector<8x11xf32>
    %53 = tpu.matmul %51, %52, %cst_35 {dimension_numbers = #tpu.dot_dimension_numbers<[1], [0], [0], [1], [0, 0, 1, 1], [], []>} : vector<8x21xbf16>, vector<21x11xbf16>, vector<8x11xf32> -> vector<8x11xf32>
    %cst_36 = arith.constant 0.000000e+00 : f32
    %54 = vector.broadcast %cst_36 : f32 to vector<8x11xf32>
    %55 = arith.maximumf %53, %54 : vector<8x11xf32>
    %56 = arith.truncf %55 : vector<8x11xf32> to vector<8x11xbf16>
    %57 = arith.truncf %40 : vector<11x10xf32> to vector<11x10xbf16>
    %cst_37 = arith.constant dense<0.000000e+00> : vector<8x10xf32>
    %58 = tpu.matmul %56, %57, %cst_37 {dimension_numbers = #tpu.dot_dimension_numbers<[1], [0], [0], [1], [0, 0, 1, 1], [], []>} : vector<8x11xbf16>, vector<11x10xbf16>, vector<8x10xf32> -> vector<8x10xf32>
    %c0_38 = arith.constant 0 : index
    %c0_39 = arith.constant 0 : index
    %59 = vector.load %arg13[%c0_38, %c0_39] : memref<8x10xf32, #tpu.memory_space<vmem>>, vector<8x10xf32>
    tpu.vector_store %arg13[%c0_38, %c0_39], %58 {strides = array<i32>} : memref<8x10xf32, #tpu.memory_space<vmem>>, vector<8x10xf32>,
    return
  }
}

</mosaic_0001>

<llo_original>
// kernel: _forward.1
$region0: #{_forward.1}
  #allocation0 [shape = 'u32[]', space=smem, size = 0x4, offset = 0x4, fixed_abs, tag = 'smem constant byte address 0x4 - core index']
  #allocation1 [shape = 'u32[144,128]{1,0:T(1,128)}', space=vmem, size = 0x12000, scoped, tag = 'internal scratch']
  %s0 = inlined_call_operand.vmem [shape: bf16[1,784], index: 0, kind: input, shape index: {}]
  %s1 = inlined_call_operand.vmem [shape: f32[8,784], index: 1, kind: input, shape index: {}]
  %s2 = inlined_call_operand.vmem [shape: bf16[784,21], index: 2, kind: input, shape index: {}]
  %s3 = inlined_call_operand.vmem [shape: bf16[784,128], index: 3, kind: input, shape index: {}]
  %s4 = inlined_call_operand.vmem [shape: f32[1,128], index: 4, kind: input, shape index: {}]
  %s5 = inlined_call_operand.vmem [shape: bf16[128,64], index: 5, kind: input, shape index: {}]
  %s6 = inlined_call_operand.vmem [shape: f32[1,64], index: 6, kind: input, shape index: {}]
  %s7 = inlined_call_operand.vmem [shape: bf16[64,320], index: 7, kind: input, shape index: {}]
  %s8 = inlined_call_operand.vmem [shape: f32[1,320], index: 8, kind: input, shape index: {}]
  %s9 = inlined_call_operand.vmem [shape: bf16[21,320], index: 9, kind: input, shape index: {}]
  %s10 = inlined_call_operand.vmem [shape: bf16[320,11], index: 10, kind: input, shape index: {}]
  %s11 = inlined_call_operand.vmem [shape: bf16[11,320], index: 11, kind: input, shape index: {}]
  %s12 = inlined_call_operand.vmem [shape: bf16[320,10], index: 12, kind: input, shape index: {}]
  %s13 = inlined_call_operand.hbm [shape: f32[8,10], index: 13, kind: output, shape index: {}]
  %s14 = sld [smem:[#allocation0]]
  $region62: #{_forward.1} parent=0
    _
  %s16 = ssub.s32 1, %s14
  %s17 = scalar_select 0, %s16, %s14
  $region1: #{_forward.1} parent=0
    #allocation2 [shape = 'u8[4096]{0}', space=vmem, size = 0x1000, scoped, tag = 'output window, operand 0, single buffered']
    #allocation3 [shape = 's32[1]{0}', space=sflag, size = 0x4, scoped, tag = 'scoped memory for _forward.1']
    %18 = vsyncpa [#allocation3], 0
    // Predicated region
    $region2: #{_forward.1} parent=1 // pred_check
      _
    $region3: #{_forward.1} parent=1 // pred_check_branch
      %20 = sbr.rel (0) target = $region5
    $region4: #{_forward.1} parent=1 // pred_region
      _
    $region5: #{_forward.1} parent=1 // pred_fallthru
      _
    // Predicated region
    $region6: #{_forward.1} parent=1 // pred_check
      _
    $region7: #{_forward.1} parent=1 // pred_check_branch
      %22 = sbr.rel (0) target = $region9
    $region8: #{_forward.1} parent=1 // pred_region
      _
    $region9: #{_forward.1} parent=1 // pred_fallthru
      _
    // Predicated region
    $region10: #{_forward.1} parent=1 // pred_check
      _
    $region11: #{_forward.1} parent=1 // pred_check_branch
      %24 = sbr.rel (0) target = $region13
    $region12: #{_forward.1} parent=1 // pred_region
      _
    $region13: #{_forward.1} parent=1 // pred_fallthru
      _
    // Predicated region
    $region14: #{_forward.1} parent=1 // pred_check
      _
    $region15: #{_forward.1} parent=1 // pred_check_branch
      %26 = sbr.rel (0) target = $region17
    $region16: #{_forward.1} parent=1 // pred_region
      _
    $region17: #{_forward.1} parent=1 // pred_fallthru
      _
    // Predicated region
    $region18: #{_forward.1} parent=1 // pred_check
      _
    $region19: #{_forward.1} parent=1 // pred_check_branch
      %28 = sbr.rel (0) target = $region21
    $region20: #{_forward.1} parent=1 // pred_region
      _
    $region21: #{_forward.1} parent=1 // pred_fallthru
      _
    // Predicated region
    $region22: #{_forward.1} parent=1 // pred_check
      _
    $region23: #{_forward.1} parent=1 // pred_check_branch
      %30 = sbr.rel (0) target = $region25
    $region24: #{_forward.1} parent=1 // pred_region
      _
    $region25: #{_forward.1} parent=1 // pred_fallthru
      _
    // Predicated region
    $region26: #{_forward.1} parent=1 // pred_check
      _
    $region27: #{_forward.1} parent=1 // pred_check_branch
      %32 = sbr.rel (0) target = $region29
    $region28: #{_forward.1} parent=1 // pred_region
      _
    $region29: #{_forward.1} parent=1 // pred_fallthru
      _
    // Predicated region
    $region30: #{_forward.1} parent=1 // pred_check
      _
    $region31: #{_forward.1} parent=1 // pred_check_branch
      %34 = sbr.rel (0) target = $region33
    $region32: #{_forward.1} parent=1 // pred_region
      _
    $region33: #{_forward.1} parent=1 // pred_fallthru
      _
    // Predicated region
    $region34: #{_forward.1} parent=1 // pred_check
      _
    $region35: #{_forward.1} parent=1 // pred_check_branch
      %36 = sbr.rel (0) target = $region37
    $region36: #{_forward.1} parent=1 // pred_region
      _
    $region37: #{_forward.1} parent=1 // pred_fallthru
      _
    // Predicated region
    $region38: #{_forward.1} parent=1 // pred_check
      _
    $region39: #{_forward.1} parent=1 // pred_check_branch
      %38 = sbr.rel (0) target = $region41
    $region40: #{_forward.1} parent=1 // pred_region
      _
    $region41: #{_forward.1} parent=1 // pred_fallthru
      _
    // Predicated region
    $region42: #{_forward.1} parent=1 // pred_check
      _
    $region43: #{_forward.1} parent=1 // pred_check_branch
      %40 = sbr.rel (0) target = $region45
    $region44: #{_forward.1} parent=1 // pred_region
      _
    $region45: #{_forward.1} parent=1 // pred_fallthru
      _
    // Predicated region
    $region46: #{_forward.1} parent=1 // pred_check
      _
    $region47: #{_forward.1} parent=1 // pred_check_branch
      %42 = sbr.rel (0) target = $region49
    $region48: #{_forward.1} parent=1 // pred_region
      _
    $region49: #{_forward.1} parent=1 // pred_fallthru
      _
    // Predicated region
    $region50: #{_forward.1} parent=1 // pred_check
      _
    $region51: #{_forward.1} parent=1 // pred_check_branch
      %44 = sbr.rel (0) target = $region53
    $region52: #{_forward.1} parent=1 // pred_region
      _
    $region53: #{_forward.1} parent=1 // pred_fallthru
      _
    %v46 = vld [vmem:[%s0] sm:$0x7f]
    %v47 = vld [vmem:[%s3] sm:$0xf]
    %v48 = vld [vmem:[%s3 + $0x4] sm:$0xf]
    %v49 = vld [vmem:[%s3 + $0x8] sm:$0xf]
    %v50 = vld [vmem:[%s3 + $0xc] sm:$0xf]
    %v51 = vld [vmem:[%s3 + $0x10] sm:$0xf]
    %v52 = vld [vmem:[%s3 + $0x14] sm:$0xf]
    %v53 = vld [vmem:[%s3 + $0x18] sm:$0xf]
    %v54 = vld [vmem:[%s3 + $0x1c] sm:$0xf]
    %v55 = vld [vmem:[%s3 + $0x20] sm:$0xf]
    %v56 = vld [vmem:[%s3 + $0x24] sm:$0xf]
    %v57 = vld [vmem:[%s3 + $0x28] sm:$0xf]
    %v58 = vld [vmem:[%s3 + $0x2c] sm:$0xf]
    %v59 = vld [vmem:[%s3 + $0x30] sm:$0xf]
    %v60 = vld [vmem:[%s3 + $0x34] sm:$0xf]
    %v61 = vld [vmem:[%s3 + $0x38] sm:$0xf]
    %v62 = vld [vmem:[%s3 + $0x3c] sm:$0xf]
    %v63 = vld [vmem:[%s3 + $0x40] sm:$0xf]
    %v64 = vld [vmem:[%s3 + $0x44] sm:$0xf]
    %v65 = vld [vmem:[%s3 + $0x48] sm:$0xf]
    %v66 = vld [vmem:[%s3 + $0x4c] sm:$0xf]
    %v67 = vld [vmem:[%s3 + $0x50] sm:$0xf]
    %v68 = vld [vmem:[%s3 + $0x54] sm:$0xf]
    %v69 = vld [vmem:[%s3 + $0x58] sm:$0xf]
    %v70 = vld [vmem:[%s3 + $0x5c] sm:$0xf]
    %v71 = vld [vmem:[%s3 + $0x60] sm:$0xf]
    %v72 = vld [vmem:[%s3 + $0x64] sm:$0xf]
    %v73 = vld [vmem:[%s3 + $0x68] sm:$0xf]
    %v74 = vld [vmem:[%s3 + $0x6c] sm:$0xf]
    %v75 = vld [vmem:[%s3 + $0x70] sm:$0xf]
    %v76 = vld [vmem:[%s3 + $0x74] sm:$0xf]
    %v77 = vld [vmem:[%s3 + $0x78] sm:$0xf]
    %v78 = vld [vmem:[%s3 + $0x7c] sm:$0xf]
    %v79 = vld [vmem:[%s3 + $0x80] sm:$0xf]
    %v80 = vld [vmem:[%s3 + $0x84] sm:$0xf]
    %v81 = vld [vmem:[%s3 + $0x88] sm:$0xf]
    %v82 = vld [vmem:[%s3 + $0x8c] sm:$0xf]
    %v83 = vld [vmem:[%s3 + $0x90] sm:$0xf]
    %v84 = vld [vmem:[%s3 + $0x94] sm:$0xf]
    %v85 = vld [vmem:[%s3 + $0x98] sm:$0xf]
    %v86 = vld [vmem:[%s3 + $0x9c] sm:$0xf]
    %v87 = vld [vmem:[%s3 + $0xa0] sm:$0xf]
    %v88 = vld [vmem:[%s3 + $0xa4] sm:$0xf]
    %v89 = vld [vmem:[%s3 + $0xa8] sm:$0xf]
    %v90 = vld [vmem:[%s3 + $0xac] sm:$0xf]
    %v91 = vld [vmem:[%s3 + $0xb0] sm:$0xf]
    %v92 = vld [vmem:[%s3 + $0xb4] sm:$0xf]
    %v93 = vld [vmem:[%s3 + $0xb8] sm:$0xf]
    %v94 = vld [vmem:[%s3 + $0xbc] sm:$0xf]
    %v95 = vld [vmem:[%s3 + $0xc0] sm:$0xf]
    %v96 = vld [vmem:[%s3 + $0xc4] sm:$0xf]
    %v97 = vld [vmem:[%s3 + $0xc8] sm:$0xf]
    %v98 = vld [vmem:[%s3 + $0xcc] sm:$0xf]
    %v99 = vld [vmem:[%s3 + $0xd0] sm:$0xf]
    %v100 = vld [vmem:[%s3 + $0xd4] sm:$0xf]
    %v101 = vld [vmem:[%s3 + $0xd8] sm:$0xf]
    %v102 = vld [vmem:[%s3 + $0xdc] sm:$0xf]
    %v103 = vld [vmem:[%s3 + $0xe0] sm:$0xf]
    %v104 = vld [vmem:[%s3 + $0xe4] sm:$0xf]
    %v105 = vld [vmem:[%s3 + $0xe8] sm:$0xf]
    %v106 = vld [vmem:[%s3 + $0xec] sm:$0xf]
    %v107 = vld [vmem:[%s3 + $0xf0] sm:$0xf]
    %v108 = vld [vmem:[%s3 + $0xf4] sm:$0xf]
    %v109 = vld [vmem:[%s3 + $0xf8] sm:$0xf]
    %v110 = vld [vmem:[%s3 + $0xfc] sm:$0xf]
    %v111 = vld [vmem:[%s3 + $0x100] sm:$0xf]
    %v112 = vld [vmem:[%s3 + $0x104] sm:$0xf]
    %v113 = vld [vmem:[%s3 + $0x108] sm:$0xf]
    %v114 = vld [vmem:[%s3 + $0x10c] sm:$0xf]
    %v115 = vld [vmem:[%s3 + $0x110] sm:$0xf]
    %v116 = vld [vmem:[%s3 + $0x114] sm:$0xf]
    %v117 = vld [vmem:[%s3 + $0x118] sm:$0xf]
    %v118 = vld [vmem:[%s3 + $0x11c] sm:$0xf]
    %v119 = vld [vmem:[%s3 + $0x120] sm:$0xf]
    %v120 = vld [vmem:[%s3 + $0x124] sm:$0xf]
    %v121 = vld [vmem:[%s3 + $0x128] sm:$0xf]
    %v122 = vld [vmem:[%s3 + $0x12c] sm:$0xf]
    %v123 = vld [vmem:[%s3 + $0x130] sm:$0xf]
    %v124 = vld [vmem:[%s3 + $0x134] sm:$0xf]
    %v125 = vld [vmem:[%s3 + $0x138] sm:$0xf]
    %v126 = vld [vmem:[%s3 + $0x13c] sm:$0xf]
    %v127 = vld [vmem:[%s3 + $0x140] sm:$0xf]
    %v128 = vld [vmem:[%s3 + $0x144] sm:$0xf]
    %v129 = vld [vmem:[%s3 + $0x148] sm:$0xf]
    %v130 = vld [vmem:[%s3 + $0x14c] sm:$0xf]
    %v131 = vld [vmem:[%s3 + $0x150] sm:$0xf]
    %v132 = vld [vmem:[%s3 + $0x154] sm:$0xf]
    %v133 = vld [vmem:[%s3 + $0x158] sm:$0xf]
    %v134 = vld [vmem:[%s3 + $0x15c] sm:$0xf]
    %v135 = vld [vmem:[%s3 + $0x160] sm:$0xf]
    %v136 = vld [vmem:[%s3 + $0x164] sm:$0xf]
    %v137 = vld [vmem:[%s3 + $0x168] sm:$0xf]
    %v138 = vld [vmem:[%s3 + $0x16c] sm:$0xf]
    %v139 = vld [vmem:[%s3 + $0x170] sm:$0xf]
    %v140 = vld [vmem:[%s3 + $0x174] sm:$0xf]
    %v141 = vld [vmem:[%s3 + $0x178] sm:$0xf]
    %v142 = vld [vmem:[%s3 + $0x17c] sm:$0xf]
    %v143 = vld [vmem:[%s3 + $0x180] sm:$0xf]
    %v144 = vld [vmem:[%s3 + $0x184] sm:$0xf]
    %v145 = vld [vmem:[%s4] sm:$0x1]
    %v147 = vcombine.high %v46, %v46
    %v149 = vunpack.c.l.s4 1966171168
    %v150 = vunpack.c.0.s8 %v149
    %v151 = vlaneseq
    %v152 = vshrl.u32 %v151, 7
    %v153 = vsub.s32 %v150, %v152
    %v154 = vrot.slane %v46, %v153
    %v156 = vunpack.c.l.s4 1966171168
    %v157 = vunpack.c.0.s8 %v156
    %v158 = vlaneseq
    %v159 = vshrl.u32 %v158, 7
    %v160 = vsub.s32 %v157, %v159
    %v161 = vrot.slane %v147, %v160
    %v162 = vcombine.high %v154, %v154
    %v163 = vcombine.high %v161, %v161
    %v165 = vunpack.c.l.s4 1966171168
    %v166 = vunpack.c.0.s8 %v165
    %v167 = vlaneseq
    %v168 = vshrl.u32 %v167, 7
    %v169 = vsub.s32 %v166, %v168
    %v170 = vrot.slane %v154, %v169
    %v172 = vunpack.c.l.s4 1966171168
    %v173 = vunpack.c.0.s8 %v172
    %v174 = vlaneseq
    %v175 = vshrl.u32 %v174, 7
    %v176 = vsub.s32 %v173, %v175
    %v177 = vrot.slane %v161, %v176
    %v179 = vunpack.c.l.s4 1966171168
    %v180 = vunpack.c.0.s8 %v179
    %v181 = vlaneseq
    %v182 = vshrl.u32 %v181, 7
    %v183 = vsub.s32 %v180, %v182
    %v184 = vrot.slane %v162, %v183
    %v186 = vunpack.c.l.s4 1966171168
    %v187 = vunpack.c.0.s8 %v186
    %v188 = vlaneseq
    %v189 = vshrl.u32 %v188, 7
    %v190 = vsub.s32 %v187, %v189
    %v191 = vrot.slane %v163, %v190
    %v192 = vcombine.high %v170, %v170
    %v193 = vcombine.high %v177, %v177
    %v194 = vcombine.high %v184, %v184
    %v299 = vunpack.c.l.b16 %v47
    %v300 = vunpack.c.l.b16 %v48
    %v301 = vunpack.c.l.b16 %v49
    %v302 = vunpack.c.l.b16 %v50
    %v303 = vunpack.c.l.b16 %v51
    %v304 = vunpack.c.l.b16 %v52
    %v305 = vunpack.c.l.b16 %v53
    %v306 = vunpack.c.l.b16 %v54
    %v307 = vunpack.c.l.b16 %v55
    %v308 = vunpack.c.l.b16 %v56
    %v309 = vunpack.c.l.b16 %v57
    %v310 = vunpack.c.l.b16 %v58
    %v311 = vunpack.c.l.b16 %v59
    %v312 = vunpack.c.l.b16 %v60
    %v313 = vunpack.c.l.b16 %v61
    %v314 = vunpack.c.l.b16 %v62
    %v315 = vunpack.c.l.b16 %v63
    %v316 = vunpack.c.l.b16 %v64
    %v317 = vunpack.c.l.b16 %v65
    %v318 = vunpack.c.l.b16 %v66
    %v319 = vunpack.c.l.b16 %v67
    %v320 = vunpack.c.l.b16 %v68
    %v321 = vunpack.c.l.b16 %v69
    %v322 = vunpack.c.l.b16 %v70
    %v323 = vunpack.c.l.b16 %v71
    %v324 = vunpack.c.l.b16 %v72
    %v325 = vunpack.c.l.b16 %v73
    %v326 = vunpack.c.l.b16 %v74
    %v327 = vunpack.c.l.b16 %v75
    %v328 = vunpack.c.l.b16 %v76
    %v329 = vunpack.c.l.b16 %v77
    %v330 = vunpack.c.l.b16 %v78
    %v331 = vunpack.c.l.b16 %v79
    %v332 = vunpack.c.l.b16 %v80
    %v333 = vunpack.c.l.b16 %v81
    %v334 = vunpack.c.l.b16 %v82
    %v335 = vunpack.c.l.b16 %v83
    %v336 = vunpack.c.l.b16 %v84
    %v337 = vunpack.c.l.b16 %v85
    %v338 = vunpack.c.l.b16 %v86
    %v339 = vunpack.c.l.b16 %v87
    %v340 = vunpack.c.l.b16 %v88
    %v341 = vunpack.c.l.b16 %v89
    %v342 = vunpack.c.l.b16 %v90
    %v343 = vunpack.c.l.b16 %v91
    %v344 = vunpack.c.l.b16 %v92
    %v345 = vunpack.c.l.b16 %v93
    %v346 = vunpack.c.l.b16 %v94
    %v347 = vunpack.c.l.b16 %v95
    %v348 = vunpack.c.l.b16 %v96
    %v349 = vunpack.c.l.b16 %v97
    %v350 = vunpack.c.l.b16 %v98
    %v351 = vunpack.c.l.b16 %v99
    %v352 = vunpack.c.l.b16 %v100
    %v353 = vunpack.c.l.b16 %v101
    %v354 = vunpack.c.l.b16 %v102
    %v355 = vunpack.c.l.b16 %v103
    %v356 = vunpack.c.l.b16 %v104
    %v357 = vunpack.c.l.b16 %v105
    %v358 = vunpack.c.l.b16 %v106
    %v359 = vunpack.c.l.b16 %v107
    %v360 = vunpack.c.l.b16 %v108
    %v361 = vunpack.c.l.b16 %v109
    %v362 = vunpack.c.l.b16 %v110
    %v363 = vunpack.c.l.b16 %v111
    %v364 = vunpack.c.l.b16 %v112
    %v365 = vunpack.c.l.b16 %v113
    %v366 = vunpack.c.l.b16 %v114
    %v367 = vunpack.c.l.b16 %v115
    %v368 = vunpack.c.l.b16 %v116
    %v369 = vunpack.c.l.b16 %v117
    %v370 = vunpack.c.l.b16 %v118
    %v371 = vunpack.c.l.b16 %v119
    %v372 = vunpack.c.l.b16 %v120
    %v373 = vunpack.c.l.b16 %v121
    %v374 = vunpack.c.l.b16 %v122
    %v375 = vunpack.c.l.b16 %v123
    %v376 = vunpack.c.l.b16 %v124
    %v377 = vunpack.c.l.b16 %v125
    %v378 = vunpack.c.l.b16 %v126
    %v379 = vunpack.c.l.b16 %v127
    %v380 = vunpack.c.l.b16 %v128
    %v381 = vunpack.c.l.b16 %v129
    %v382 = vunpack.c.l.b16 %v130
    %v383 = vunpack.c.l.b16 %v131
    %v384 = vunpack.c.l.b16 %v132
    %v385 = vunpack.c.l.b16 %v133
    %v386 = vunpack.c.l.b16 %v134
    %v387 = vunpack.c.l.b16 %v135
    %v388 = vunpack.c.l.b16 %v136
    %v389 = vunpack.c.l.b16 %v137
    %v390 = vunpack.c.l.b16 %v138
    %v391 = vunpack.c.l.b16 %v139
    %v392 = vunpack.c.l.b16 %v140
    %v393 = vunpack.c.l.b16 %v141
    %v394 = vunpack.c.l.b16 %v142
    %v395 = vunpack.c.l.b16 %v143
    %v396 = vunpack.c.l.b16 %v144
    %v397 = vpack.c.b16 %v300, %v299
    %v398 = vpack.c.b16 %v302, %v301
    %v399 = vpack.c.b16 %v304, %v303
    %v400 = vpack.c.b16 %v306, %v305
    %v401 = vpack.c.b16 %v308, %v307
    %v402 = vpack.c.b16 %v310, %v309
    %v403 = vpack.c.b16 %v312, %v311
    %v404 = vpack.c.b16 %v314, %v313
    %v405 = vpack.c.b16 %v316, %v315
    %v406 = vpack.c.b16 %v318, %v317
    %v407 = vpack.c.b16 %v320, %v319
    %v408 = vpack.c.b16 %v322, %v321
    %v409 = vpack.c.b16 %v324, %v323
    %v410 = vpack.c.b16 %v326, %v325
    %v411 = vpack.c.b16 %v328, %v327
    %v412 = vpack.c.b16 %v330, %v329
    %v413 = vpack.c.b16 %v332, %v331
    %v414 = vpack.c.b16 %v334, %v333
    %v415 = vpack.c.b16 %v336, %v335
    %v416 = vpack.c.b16 %v338, %v337
    %v417 = vpack.c.b16 %v340, %v339
    %v418 = vpack.c.b16 %v342, %v341
    %v419 = vpack.c.b16 %v344, %v343
    %v420 = vpack.c.b16 %v346, %v345
    %v421 = vpack.c.b16 %v348, %v347
    %v422 = vpack.c.b16 %v350, %v349
    %v423 = vpack.c.b16 %v352, %v351
    %v424 = vpack.c.b16 %v354, %v353
    %v425 = vpack.c.b16 %v356, %v355
    %v426 = vpack.c.b16 %v358, %v357
    %v427 = vpack.c.b16 %v360, %v359
    %v428 = vpack.c.b16 %v362, %v361
    %v429 = vpack.c.b16 %v364, %v363
    %v430 = vpack.c.b16 %v366, %v365
    %v431 = vpack.c.b16 %v368, %v367
    %v432 = vpack.c.b16 %v370, %v369
    %v433 = vpack.c.b16 %v372, %v371
    %v434 = vpack.c.b16 %v374, %v373
    %v435 = vpack.c.b16 %v376, %v375
    %v436 = vpack.c.b16 %v378, %v377
    %v437 = vpack.c.b16 %v380, %v379
    %v438 = vpack.c.b16 %v382, %v381
    %v439 = vpack.c.b16 %v384, %v383
    %v440 = vpack.c.b16 %v386, %v385
    %v441 = vpack.c.b16 %v388, %v387
    %v442 = vpack.c.b16 %v390, %v389
    %v443 = vpack.c.b16 %v392, %v391
    %v444 = vpack.c.b16 %v394, %v393
    %v445 = vpack.c.b16 %v396, %v395
    %vm495 = vcmask 130048
    %v497 = vsel %vm495, %v193, 0
    %499 = vmatprep.subr.bf16.mxu0 0
    %500 = vmatpush1.bf16.msra.mxu0 %v404
    %501 = vmatprep.subr.bf16.mxu0 0
    %502 = vmatpush1.bf16.msra.mxu0 %v403
    %503 = vmatprep.subr.bf16.mxu0 0
    %504 = vmatpush1.bf16.msra.mxu0 %v402
    %505 = vmatprep.subr.bf16.mxu0 0
    %506 = vmatpush1.bf16.msra.mxu0 %v401
    %507 = vmatprep.subr.bf16.mxu0 0
    %508 = vmatpush1.bf16.msra.mxu0 %v400
    %509 = vmatprep.subr.bf16.mxu0 0
    %510 = vmatpush1.bf16.msra.mxu0 %v399
    %511 = vmatprep.subr.bf16.mxu0 0
    %512 = vmatpush1.bf16.msra.mxu0 %v398
    %513 = vmatprep.subr.bf16.mxu0 0
    %514 = vmatpush1.bf16.msra.mxu0 %v397
    %515 = vmatprep.subr.bf16.mxu0 0
    %516 = vmatpush2.bf16.msra.mxu0 %v412
    %517 = vmatprep.subr.bf16.mxu0 0
    %518 = vmatpush2.bf16.msra.mxu0 %v411
    %519 = vmatprep.subr.bf16.mxu0 0
    %520 = vmatpush2.bf16.msra.mxu0 %v410
    %521 = vmatprep.subr.bf16.mxu0 0
    %522 = vmatpush2.bf16.msra.mxu0 %v409
    %523 = vmatprep.subr.bf16.mxu0 0
    %524 = vmatpush2.bf16.msra.mxu0 %v408
    %525 = vmatprep.subr.bf16.mxu0 0
    %526 = vmatpush2.bf16.msra.mxu0 %v407
    %527 = vmatprep.subr.bf16.mxu0 0
    %528 = vmatpush2.bf16.msra.mxu0 %v406
    %529 = vmatprep.subr.bf16.mxu0 0
    %530 = vmatpush2.bf16.msra.mxu0 %v405
    %531 = vmatprep.mubr.bf16.mxu0 %v184
    %532 = vmatmul.mubr.bf16.gmra.mxu0 %v170
    %v533 = vpop.f32.mrf.mxu0
    %v534 = vadd.f32 %v145, %v533
    %v535 = vpop.f32.mrf.mxu0
    %v536 = vpop.f32.mrf.mxu0
    %v537 = vpop.f32.mrf.mxu0
    %538 = vdwg.mxu0
    %539 = vmatprep.subr.bf16.mxu0 0
    %540 = vmatpush1.bf16.msra.mxu0 %v420
    %541 = vmatprep.subr.bf16.mxu0 0
    %542 = vmatpush1.bf16.msra.mxu0 %v419
    %543 = vmatprep.subr.bf16.mxu0 0
    %544 = vmatpush1.bf16.msra.mxu0 %v418
    %545 = vmatprep.subr.bf16.mxu0 0
    %546 = vmatpush1.bf16.msra.mxu0 %v417
    %547 = vmatprep.subr.bf16.mxu0 0
    %548 = vmatpush1.bf16.msra.mxu0 %v416
    %549 = vmatprep.subr.bf16.mxu0 0
    %550 = vmatpush1.bf16.msra.mxu0 %v415
    %551 = vmatprep.subr.bf16.mxu0 0
    %552 = vmatpush1.bf16.msra.mxu0 %v414
    %553 = vmatprep.subr.bf16.mxu0 0
    %554 = vmatpush1.bf16.msra.mxu0 %v413
    %555 = vmatprep.subr.bf16.mxu0 0
    %556 = vmatpush2.bf16.msra.mxu0 %v428
    %557 = vmatprep.subr.bf16.mxu0 0
    %558 = vmatpush2.bf16.msra.mxu0 %v427
    %559 = vmatprep.subr.bf16.mxu0 0
    %560 = vmatpush2.bf16.msra.mxu0 %v426
    %561 = vmatprep.subr.bf16.mxu0 0
    %562 = vmatpush2.bf16.msra.mxu0 %v425
    %563 = vmatprep.subr.bf16.mxu0 0
    %564 = vmatpush2.bf16.msra.mxu0 %v424
    %565 = vmatprep.subr.bf16.mxu0 0
    %566 = vmatpush2.bf16.msra.mxu0 %v423
    %567 = vmatprep.subr.bf16.mxu0 0
    %568 = vmatpush2.bf16.msra.mxu0 %v422
    %569 = vmatprep.subr.bf16.mxu0 0
    %570 = vmatpush2.bf16.msra.mxu0 %v421
    %571 = vmatprep.mubr.bf16.mxu0 %v194
    %572 = vmatmul.mubr.bf16.gmra.mxu0 %v192
    %v573 = vpop.f32.mrf.mxu0
    %v574 = vadd.f32 %v534, %v573
    %v575 = vpop.f32.mrf.mxu0
    %v576 = vpop.f32.mrf.mxu0
    %v577 = vpop.f32.mrf.mxu0
    %578 = vdwg.mxu0
    %579 = vmatprep.subr.bf16.mxu0 0
    %580 = vmatpush1.bf16.msra.mxu0 %v436
    %581 = vmatprep.subr.bf16.mxu0 0
    %582 = vmatpush1.bf16.msra.mxu0 %v435
    %583 = vmatprep.subr.bf16.mxu0 0
    %584 = vmatpush1.bf16.msra.mxu0 %v434
    %585 = vmatprep.subr.bf16.mxu0 0
    %586 = vmatpush1.bf16.msra.mxu0 %v433
    %587 = vmatprep.subr.bf16.mxu0 0
    %588 = vmatpush1.bf16.msra.mxu0 %v432
    %589 = vmatprep.subr.bf16.mxu0 0
    %590 = vmatpush1.bf16.msra.mxu0 %v431
    %591 = vmatprep.subr.bf16.mxu0 0
    %592 = vmatpush1.bf16.msra.mxu0 %v430
    %593 = vmatprep.subr.bf16.mxu0 0
    %594 = vmatpush1.bf16.msra.mxu0 %v429
    %595 = vmatprep.subr.bf16.mxu0 0
    %596 = vmatpush2.bf16.msra.mxu0 %v444
    %597 = vmatprep.subr.bf16.mxu0 0
    %598 = vmatpush2.bf16.msra.mxu0 %v443
    %599 = vmatprep.subr.bf16.mxu0 0
    %600 = vmatpush2.bf16.msra.mxu0 %v442
    %601 = vmatprep.subr.bf16.mxu0 0
    %602 = vmatpush2.bf16.msra.mxu0 %v441
    %603 = vmatprep.subr.bf16.mxu0 0
    %604 = vmatpush2.bf16.msra.mxu0 %v440
    %605 = vmatprep.subr.bf16.mxu0 0
    %606 = vmatpush2.bf16.msra.mxu0 %v439
    %607 = vmatprep.subr.bf16.mxu0 0
    %608 = vmatpush2.bf16.msra.mxu0 %v438
    %609 = vmatprep.subr.bf16.mxu0 0
    %610 = vmatpush2.bf16.msra.mxu0 %v437
    %611 = vmatprep.mubr.bf16.mxu0 %v191
    %612 = vmatmul.mubr.bf16.gmra.mxu0 %v177
    %v613 = vpop.f32.mrf.mxu0
    %v614 = vadd.f32 %v574, %v613
    %v615 = vpop.f32.mrf.mxu0
    %v616 = vpop.f32.mrf.mxu0
    %v617 = vpop.f32.mrf.mxu0
    %618 = vdwg.mxu0
    %619 = vmatprep.subr.bf16.mxu0 0
    %620 = vmatpush1.bf16.msra.mxu0 0
    %621 = vmatprep.subr.bf16.mxu0 0
    %622 = vmatpush1.bf16.msra.mxu0 0
    %623 = vmatprep.subr.bf16.mxu0 0
    %624 = vmatpush1.bf16.msra.mxu0 0
    %625 = vmatprep.subr.bf16.mxu0 0
    %626 = vmatpush1.bf16.msra.mxu0 0
    %627 = vmatprep.subr.bf16.mxu0 0
    %628 = vmatpush1.bf16.msra.mxu0 0
    %629 = vmatprep.subr.bf16.mxu0 0
    %630 = vmatpush1.bf16.msra.mxu0 0
    %631 = vmatprep.subr.bf16.mxu0 0
    %632 = vmatpush1.bf16.msra.mxu0 0
    %633 = vmatprep.subr.bf16.mxu0 0
    %634 = vmatpush1.bf16.msra.mxu0 %v445
    %635 = vmatprep.subr.bf16.mxu0 0
    %636 = vmatpush2.bf16.msra.mxu0 0
    %637 = vmatprep.subr.bf16.mxu0 0
    %638 = vmatpush2.bf16.msra.mxu0 0
    %639 = vmatprep.subr.bf16.mxu0 0
    %640 = vmatpush2.bf16.msra.mxu0 0
    %641 = vmatprep.subr.bf16.mxu0 0
    %642 = vmatpush2.bf16.msra.mxu0 0
    %643 = vmatprep.subr.bf16.mxu0 0
    %644 = vmatpush2.bf16.msra.mxu0 0
    %645 = vmatprep.subr.bf16.mxu0 0
    %646 = vmatpush2.bf16.msra.mxu0 0
    %647 = vmatprep.subr.bf16.mxu0 0
    %648 = vmatpush2.bf16.msra.mxu0 0
    %649 = vmatprep.subr.bf16.mxu0 0
    %650 = vmatpush2.bf16.msra.mxu0 0
    %651 = vmatprep.mubr.bf16.mxu0 0
    %652 = vmatmul.mubr.bf16.gmra.mxu0 %v497
    %v653 = vpop.f32.mrf.mxu0
    %v654 = vadd.f32 %v614, %v653
    %v655 = vpop.f32.mrf.mxu0
    %v656 = vpop.f32.mrf.mxu0
    %v657 = vpop.f32.mrf.mxu0
    %658 = vdwg.mxu0
    %v659 = vmax.f32 %v654, 0.0
    %v660 = vpack.c.bf16 %v659, %v659
    %v661 = vld [vmem:[%s5] sm:$0xf]
    %v662 = vld [vmem:[%s5 + $0x4] sm:$0xf]
    %v663 = vld [vmem:[%s5 + $0x8] sm:$0xf]
    %v664 = vld [vmem:[%s5 + $0xc] sm:$0xf]
    %v665 = vld [vmem:[%s5 + $0x10] sm:$0xf]
    %v666 = vld [vmem:[%s5 + $0x14] sm:$0xf]
    %v667 = vld [vmem:[%s5 + $0x18] sm:$0xf]
    %v668 = vld [vmem:[%s5 + $0x1c] sm:$0xf]
    %v669 = vld [vmem:[%s5 + $0x20] sm:$0xf]
    %v670 = vld [vmem:[%s5 + $0x24] sm:$0xf]
    %v671 = vld [vmem:[%s5 + $0x28] sm:$0xf]
    %v672 = vld [vmem:[%s5 + $0x2c] sm:$0xf]
    %v673 = vld [vmem:[%s5 + $0x30] sm:$0xf]
    %v674 = vld [vmem:[%s5 + $0x34] sm:$0xf]
    %v675 = vld [vmem:[%s5 + $0x38] sm:$0xf]
    %v676 = vld [vmem:[%s5 + $0x3c] sm:$0xf]
    %v677 = vld [vmem:[%s6] sm:$0x1]
    %v694 = vunpack.c.l.b16 %v661
    %v695 = vunpack.c.l.b16 %v662
    %v696 = vunpack.c.l.b16 %v663
    %v697 = vunpack.c.l.b16 %v664
    %v698 = vunpack.c.l.b16 %v665
    %v699 = vunpack.c.l.b16 %v666
    %v700 = vunpack.c.l.b16 %v667
    %v701 = vunpack.c.l.b16 %v668
    %v702 = vunpack.c.l.b16 %v669
    %v703 = vunpack.c.l.b16 %v670
    %v704 = vunpack.c.l.b16 %v671
    %v705 = vunpack.c.l.b16 %v672
    %v706 = vunpack.c.l.b16 %v673
    %v707 = vunpack.c.l.b16 %v674
    %v708 = vunpack.c.l.b16 %v675
    %v709 = vunpack.c.l.b16 %v676
    %v710 = vpack.c.b16 %v695, %v694
    %v711 = vpack.c.b16 %v697, %v696
    %v712 = vpack.c.b16 %v699, %v698
    %v713 = vpack.c.b16 %v701, %v700
    %v714 = vpack.c.b16 %v703, %v702
    %v715 = vpack.c.b16 %v705, %v704
    %v716 = vpack.c.b16 %v707, %v706
    %v717 = vpack.c.b16 %v709, %v708
    %726 = vmatprep.subr.bf16.mxu0 0
    %727 = vmatpush1.bf16.msra.mxu0 %v717
    %728 = vmatprep.subr.bf16.mxu0 0
    %729 = vmatpush1.bf16.msra.mxu0 %v716
    %730 = vmatprep.subr.bf16.mxu0 0
    %731 = vmatpush1.bf16.msra.mxu0 %v715
    %732 = vmatprep.subr.bf16.mxu0 0
    %733 = vmatpush1.bf16.msra.mxu0 %v714
    %734 = vmatprep.subr.bf16.mxu0 0
    %735 = vmatpush1.bf16.msra.mxu0 %v713
    %736 = vmatprep.subr.bf16.mxu0 0
    %737 = vmatpush1.bf16.msra.mxu0 %v712
    %738 = vmatprep.subr.bf16.mxu0 0
    %739 = vmatpush1.bf16.msra.mxu0 %v711
    %740 = vmatprep.subr.bf16.mxu0 0
    %741 = vmatpush1.bf16.msra.mxu0 %v710
    %742 = vmatprep.subr.bf16.mxu0 0
    %743 = vmatpush2.bf16.msra.mxu0 0
    %744 = vmatprep.subr.bf16.mxu0 0
    %745 = vmatpush2.bf16.msra.mxu0 0
    %746 = vmatprep.subr.bf16.mxu0 0
    %747 = vmatpush2.bf16.msra.mxu0 0
    %748 = vmatprep.subr.bf16.mxu0 0
    %749 = vmatpush2.bf16.msra.mxu0 0
    %750 = vmatprep.subr.bf16.mxu0 0
    %751 = vmatpush2.bf16.msra.mxu0 0
    %752 = vmatprep.subr.bf16.mxu0 0
    %753 = vmatpush2.bf16.msra.mxu0 0
    %754 = vmatprep.subr.bf16.mxu0 0
    %755 = vmatpush2.bf16.msra.mxu0 0
    %756 = vmatprep.subr.bf16.mxu0 0
    %757 = vmatpush2.bf16.msra.mxu0 0
    %758 = vmatprep.mubr.bf16.mxu0 0
    %759 = vmatmul.mubr.bf16.gmra.mxu0 %v660
    %v760 = vpop.f32.mrf.mxu0
    %v761 = vadd.f32 %v677, %v760
    %v762 = vpop.f32.mrf.mxu0
    %v763 = vpop.f32.mrf.mxu0
    %v764 = vpop.f32.mrf.mxu0
    %765 = vdwg.mxu0
    %v766 = vmax.f32 %v761, 0.0
    %v767 = vpack.c.bf16 %v766, %v766
    %v768 = vld [vmem:[%s7] sm:$0xff]
    %v769 = vld [vmem:[%s7 + $0x8] sm:$0xf]
    %v770 = vld [vmem:[%s7 + $0xc] sm:$0xff]
    %v771 = vld [vmem:[%s7 + $0x14] sm:$0xf]
    %v772 = vld [vmem:[%s7 + $0x18] sm:$0xff]
    %v773 = vld [vmem:[%s7 + $0x20] sm:$0xf]
    %v774 = vld [vmem:[%s7 + $0x24] sm:$0xff]
    %v775 = vld [vmem:[%s7 + $0x2c] sm:$0xf]
    %v776 = vld [vmem:[%s7 + $0x30] sm:$0xff]
    %v777 = vld [vmem:[%s7 + $0x38] sm:$0xf]
    %v778 = vld [vmem:[%s7 + $0x3c] sm:$0xff]
    %v779 = vld [vmem:[%s7 + $0x44] sm:$0xf]
    %v780 = vld [vmem:[%s7 + $0x48] sm:$0xff]
    %v781 = vld [vmem:[%s7 + $0x50] sm:$0xf]
    %v782 = vld [vmem:[%s7 + $0x54] sm:$0xff]
    %v783 = vld [vmem:[%s7 + $0x5c] sm:$0xf]
    %v784 = vld [vmem:[%s8] sm:$0x7]
    %v801 = vunpack.c.l.b16 %v768
    %v802 = vunpack.c.h.b16 %v768
    %v803 = vunpack.c.l.b16 %v769
    %v804 = vunpack.c.l.b16 %v770
    %v805 = vunpack.c.h.b16 %v770
    %v806 = vunpack.c.l.b16 %v771
    %v807 = vunpack.c.l.b16 %v772
    %v808 = vunpack.c.h.b16 %v772
    %v809 = vunpack.c.l.b16 %v773
    %v810 = vunpack.c.l.b16 %v774
    %v811 = vunpack.c.h.b16 %v774
    %v812 = vunpack.c.l.b16 %v775
    %v813 = vunpack.c.l.b16 %v776
    %v814 = vunpack.c.h.b16 %v776
    %v815 = vunpack.c.l.b16 %v777
    %v816 = vunpack.c.l.b16 %v778
    %v817 = vunpack.c.h.b16 %v778
    %v818 = vunpack.c.l.b16 %v779
    %v819 = vunpack.c.l.b16 %v780
    %v820 = vunpack.c.h.b16 %v780
    %v821 = vunpack.c.l.b16 %v781
    %v822 = vunpack.c.l.b16 %v782
    %v823 = vunpack.c.h.b16 %v782
    %v824 = vunpack.c.l.b16 %v783
    %v825 = vpack.c.b16 %v804, %v801
    %v826 = vpack.c.b16 %v805, %v802
    %v827 = vpack.c.b16 %v806, %v803
    %v828 = vpack.c.b16 %v810, %v807
    %v829 = vpack.c.b16 %v811, %v808
    %v830 = vpack.c.b16 %v812, %v809
    %v831 = vpack.c.b16 %v816, %v813
    %v832 = vpack.c.b16 %v817, %v814
    %v833 = vpack.c.b16 %v818, %v815
    %v834 = vpack.c.b16 %v822, %v819
    %v835 = vpack.c.b16 %v823, %v820
    %v836 = vpack.c.b16 %v824, %v821
    %v850 = vlaneseq
    %v851 = vshrl.u32 %v850, 7
    %v852 = vsub.s32 0, %v851
    %v853 = vrot.slane %v784, %v852
    %v854 = vlaneseq
    %v855 = vshrl.u32 %v854, 7
    %v856 = vsub.s32 1, %v855
    %v857 = vrot.slane %v784, %v856
    %v858 = vlaneseq
    %v859 = vshrl.u32 %v858, 7
    %v860 = vsub.s32 2, %v859
    %v861 = vrot.slane %v784, %v860
    %vm865 = vcmask 523264
    %v867 = vsel %vm865, %v767, 0
    %869 = vmatprep.subr.bf16.mxu0 0
    %870 = vmatpush1.bf16.msra.mxu0 0
    %871 = vmatprep.subr.bf16.mxu0 0
    %872 = vmatpush1.bf16.msra.mxu0 0
    %873 = vmatprep.subr.bf16.mxu0 0
    %874 = vmatpush1.bf16.msra.mxu0 0
    %875 = vmatprep.subr.bf16.mxu0 0
    %876 = vmatpush1.bf16.msra.mxu0 0
    %877 = vmatprep.subr.bf16.mxu0 %v835
    %878 = vmatpush1.bf16.msra.mxu0 %v834
    %879 = vmatprep.subr.bf16.mxu0 %v832
    %880 = vmatpush1.bf16.msra.mxu0 %v831
    %881 = vmatprep.subr.bf16.mxu0 %v829
    %882 = vmatpush1.bf16.msra.mxu0 %v828
    %883 = vmatprep.subr.bf16.mxu0 %v826
    %884 = vmatpush1.bf16.msra.mxu0 %v825
    %885 = vmatprep.subr.bf16.mxu0 0
    %886 = vmatpush2.bf16.msra.mxu0 0
    %887 = vmatprep.subr.bf16.mxu0 0
    %888 = vmatpush2.bf16.msra.mxu0 0
    %889 = vmatprep.subr.bf16.mxu0 0
    %890 = vmatpush2.bf16.msra.mxu0 0
    %891 = vmatprep.subr.bf16.mxu0 0
    %892 = vmatpush2.bf16.msra.mxu0 0
    %893 = vmatprep.subr.bf16.mxu0 0
    %894 = vmatpush2.bf16.msra.mxu0 0
    %895 = vmatprep.subr.bf16.mxu0 0
    %896 = vmatpush2.bf16.msra.mxu0 0
    %897 = vmatprep.subr.bf16.mxu0 0
    %898 = vmatpush2.bf16.msra.mxu0 0
    %899 = vmatprep.subr.bf16.mxu0 0
    %900 = vmatpush2.bf16.msra.mxu0 0
    %901 = vmatprep.mubr.bf16.mxu0 0
    %902 = vmatmul.mubr.bf16.gmra.mxu0 %v867
    %v903 = vpop.f32.mrf.mxu0
    %v904 = vadd.f32 %v853, %v903
    %v905 = vpop.f32.mrf.mxu0
    %v906 = vadd.f32 %v857, %v905
    %v907 = vpop.f32.mrf.mxu0
    %v908 = vpop.f32.mrf.mxu0
    %909 = vdwg.mxu0
    %910 = vmatprep.subr.bf16.mxu0 0
    %911 = vmatpush1.bf16.msra.mxu0 0
    %912 = vmatprep.subr.bf16.mxu0 0
    %913 = vmatpush1.bf16.msra.mxu0 0
    %914 = vmatprep.subr.bf16.mxu0 0
    %915 = vmatpush1.bf16.msra.mxu0 0
    %916 = vmatprep.subr.bf16.mxu0 0
    %917 = vmatpush1.bf16.msra.mxu0 0
    %918 = vmatprep.subr.bf16.mxu0 0
    %919 = vmatpush1.bf16.msra.mxu0 %v836
    %920 = vmatprep.subr.bf16.mxu0 0
    %921 = vmatpush1.bf16.msra.mxu0 %v833
    %922 = vmatprep.subr.bf16.mxu0 0
    %923 = vmatpush1.bf16.msra.mxu0 %v830
    %924 = vmatprep.subr.bf16.mxu0 0
    %925 = vmatpush1.bf16.msra.mxu0 %v827
    %926 = vmatprep.subr.bf16.mxu0 0
    %927 = vmatpush2.bf16.msra.mxu0 0
    %928 = vmatprep.subr.bf16.mxu0 0
    %929 = vmatpush2.bf16.msra.mxu0 0
    %930 = vmatprep.subr.bf16.mxu0 0
    %931 = vmatpush2.bf16.msra.mxu0 0
    %932 = vmatprep.subr.bf16.mxu0 0
    %933 = vmatpush2.bf16.msra.mxu0 0
    %934 = vmatprep.subr.bf16.mxu0 0
    %935 = vmatpush2.bf16.msra.mxu0 0
    %936 = vmatprep.subr.bf16.mxu0 0
    %937 = vmatpush2.bf16.msra.mxu0 0
    %938 = vmatprep.subr.bf16.mxu0 0
    %939 = vmatpush2.bf16.msra.mxu0 0
    %940 = vmatprep.subr.bf16.mxu0 0
    %941 = vmatpush2.bf16.msra.mxu0 0
    %942 = vmatprep.mubr.bf16.mxu0 0
    %943 = vmatmul.mubr.bf16.gmra.mxu0 %v867
    %v944 = vpop.f32.mrf.mxu0
    %v945 = vadd.f32 %v861, %v944
    %v946 = vpop.f32.mrf.mxu0
    %v947 = vpop.f32.mrf.mxu0
    %v948 = vpop.f32.mrf.mxu0
    %949 = vdwg.mxu0
    %v950 = vpack.c.bf16 %v904, %v904
    %v951 = vpack.c.bf16 %v906, %v906
    %v952 = vpack.c.bf16 %v945, %v945
    %v953 = vld [vmem:[%s9] sm:$0xff]
    %v954 = vld [vmem:[%s9 + $0x8] sm:$0xf]
    %v955 = vld [vmem:[%s9 + $0xc] sm:$0xff]
    %v956 = vld [vmem:[%s9 + $0x14] sm:$0xf]
    %v957 = vld [vmem:[%s9 + $0x18] sm:$0x77]
    %v958 = vld [vmem:[%s9 + $0x20] sm:$0x7]
    %v960 = vpack.i.b16 %v950, %v950
    %v962 = vlaneseq
    %v963 = vshrl.u32 %v962, 7
    %v964 = vsub.s32 0, %v963
    %v965 = vrot.slane %v960, %v964
    %v967 = vpack.i.b16 %v951, %v951
    %v969 = vlaneseq
    %v970 = vshrl.u32 %v969, 7
    %v971 = vsub.s32 0, %v970
    %v972 = vrot.slane %v967, %v971
    %v974 = vpack.i.b16 %v952, %v952
    %v976 = vlaneseq
    %v977 = vshrl.u32 %v976, 7
    %v978 = vsub.s32 0, %v977
    %v979 = vrot.slane %v974, %v978
    %v983 = vunpack.c.l.b16 %v965
    %v984 = vunpack.c.l.b16 %v972
    %v985 = vunpack.c.l.b16 %v979
    %v986 = vpack.c.b16 %v984, %v983
    %v987 = vpack.c.b16 %v985, %v985
    %v990 = vmul.bf16 %v953, %v986
    %v991 = vmul.bf16 %v954, %v987
    %v992 = vmul.bf16 %v955, %v986
    %v993 = vmul.bf16 %v956, %v987
    %v994 = vmul.bf16 %v957, %v986
    %v995 = vmul.bf16 %v958, %v987
    %v996 = vld [vmem:[%s10] sm:$0xf]
    %v997 = vld [vmem:[%s10 + $0x4] sm:$0xf]
    %v998 = vld [vmem:[%s10 + $0x8] sm:$0xf]
    %v999 = vld [vmem:[%s10 + $0xc] sm:$0xf]
    %v1000 = vld [vmem:[%s10 + $0x10] sm:$0xf]
    %v1001 = vld [vmem:[%s10 + $0x14] sm:$0xf]
    %v1002 = vld [vmem:[%s10 + $0x18] sm:$0xf]
    %v1003 = vld [vmem:[%s10 + $0x1c] sm:$0xf]
    %v1004 = vld [vmem:[%s10 + $0x20] sm:$0xf]
    %v1005 = vld [vmem:[%s10 + $0x24] sm:$0xf]
    %v1006 = vld [vmem:[%s10 + $0x28] sm:$0xf]
    %v1007 = vld [vmem:[%s10 + $0x2c] sm:$0xf]
    %v1008 = vld [vmem:[%s10 + $0x30] sm:$0xf]
    %v1009 = vld [vmem:[%s10 + $0x34] sm:$0xf]
    %v1010 = vld [vmem:[%s10 + $0x38] sm:$0xf]
    %v1011 = vld [vmem:[%s10 + $0x3c] sm:$0xf]
    %v1012 = vld [vmem:[%s10 + $0x40] sm:$0xf]
    %v1013 = vld [vmem:[%s10 + $0x44] sm:$0xf]
    %v1014 = vld [vmem:[%s10 + $0x48] sm:$0xf]
    %v1015 = vld [vmem:[%s10 + $0x4c] sm:$0xf]
    %v1016 = vld [vmem:[%s10 + $0x50] sm:$0xf]
    %v1017 = vld [vmem:[%s10 + $0x54] sm:$0xf]
    %v1018 = vld [vmem:[%s10 + $0x58] sm:$0xf]
    %v1019 = vld [vmem:[%s10 + $0x5c] sm:$0xf]
    %v1020 = vld [vmem:[%s10 + $0x60] sm:$0xf]
    %v1021 = vld [vmem:[%s10 + $0x64] sm:$0xf]
    %v1022 = vld [vmem:[%s10 + $0x68] sm:$0xf]
    %v1023 = vld [vmem:[%s10 + $0x6c] sm:$0xf]
    %v1024 = vld [vmem:[%s10 + $0x70] sm:$0xf]
    %v1025 = vld [vmem:[%s10 + $0x74] sm:$0xf]
    %v1026 = vld [vmem:[%s10 + $0x78] sm:$0xf]
    %v1027 = vld [vmem:[%s10 + $0x7c] sm:$0xf]
    %v1028 = vld [vmem:[%s10 + $0x80] sm:$0xf]
    %v1029 = vld [vmem:[%s10 + $0x84] sm:$0xf]
    %v1030 = vld [vmem:[%s10 + $0x88] sm:$0xf]
    %v1031 = vld [vmem:[%s10 + $0x8c] sm:$0xf]
    %v1032 = vld [vmem:[%s10 + $0x90] sm:$0xf]
    %v1033 = vld [vmem:[%s10 + $0x94] sm:$0xf]
    %v1034 = vld [vmem:[%s10 + $0x98] sm:$0xf]
    %v1035 = vld [vmem:[%s10 + $0x9c] sm:$0xf]
    %v1036 = vlaneseq
    %v1037 = vshrl.u32 %v1036, 7
    %v1038 = vadd.s32 %v1037, 8
    %v1039 = vadd.s32 %v1037, 16
    %v1040 = vlaneseq
    %v1041 = vand.u32 %v1040, 127
    %vm1042 = vcmp.eq.s32.totalorder %v1037, 20
    %vm1043 = vcmp.eq.s32.totalorder %v1038, 20
    %vm1044 = vcmp.eq.s32.totalorder %v1039, 20
    %vm1045 = vcmp.eq.s32.totalorder %v1041, 10
    %vm1046 = vmand %vm1042, %vm1045
    %vm1047 = vmand %vm1043, %vm1045
    %vm1048 = vmand %vm1044, %vm1045
    %v1049 = vsel %vm1046, 1.0, 0.0
    %v1050 = vsel %vm1047, 1.0, 0.0
    %v1051 = vsel %vm1048, 1.0, 0.0
    %v1058 = vunpack.c.l.b16 %v990
    %v1059 = vunpack.c.h.b16 %v990
    %v1060 = vunpack.c.l.b16 %v991
    %v1061 = vunpack.c.l.b16 %v992
    %v1062 = vunpack.c.h.b16 %v992
    %v1063 = vunpack.c.l.b16 %v993
    %v1064 = vunpack.c.l.b16 %v994
    %v1065 = vunpack.c.h.b16 %v994
    %v1066 = vunpack.c.l.b16 %v995
    %v1067 = vpack.c.b16 %v1061, %v1058
    %v1068 = vpack.c.b16 %v1062, %v1059
    %v1069 = vpack.c.b16 %v1063, %v1060
    %v1070 = vpack.c.b16 %v1064, %v1064
    %v1071 = vpack.c.b16 %v1065, %v1065
    %v1072 = vpack.c.b16 %v1066, %v1066
    %v1117 = vunpack.c.l.b16 %v996
    %v1118 = vunpack.c.l.b16 %v997
    %v1119 = vunpack.c.l.b16 %v998
    %v1120 = vunpack.c.l.b16 %v999
    %v1121 = vunpack.c.l.b16 %v1000
    %v1122 = vunpack.c.l.b16 %v1001
    %v1123 = vunpack.c.l.b16 %v1002
    %v1124 = vunpack.c.l.b16 %v1003
    %v1125 = vunpack.c.l.b16 %v1004
    %v1126 = vunpack.c.l.b16 %v1005
    %v1127 = vunpack.c.l.b16 %v1006
    %v1128 = vunpack.c.l.b16 %v1007
    %v1129 = vunpack.c.l.b16 %v1008
    %v1130 = vunpack.c.l.b16 %v1009
    %v1131 = vunpack.c.l.b16 %v1010
    %v1132 = vunpack.c.l.b16 %v1011
    %v1133 = vunpack.c.l.b16 %v1012
    %v1134 = vunpack.c.l.b16 %v1013
    %v1135 = vunpack.c.l.b16 %v1014
    %v1136 = vunpack.c.l.b16 %v1015
    %v1137 = vunpack.c.l.b16 %v1016
    %v1138 = vunpack.c.l.b16 %v1017
    %v1139 = vunpack.c.l.b16 %v1018
    %v1140 = vunpack.c.l.b16 %v1019
    %v1141 = vunpack.c.l.b16 %v1020
    %v1142 = vunpack.c.l.b16 %v1021
    %v1143 = vunpack.c.l.b16 %v1022
    %v1144 = vunpack.c.l.b16 %v1023
    %v1145 = vunpack.c.l.b16 %v1024
    %v1146 = vunpack.c.l.b16 %v1025
    %v1147 = vunpack.c.l.b16 %v1026
    %v1148 = vunpack.c.l.b16 %v1027
    %v1149 = vunpack.c.l.b16 %v1028
    %v1150 = vunpack.c.l.b16 %v1029
    %v1151 = vunpack.c.l.b16 %v1030
    %v1152 = vunpack.c.l.b16 %v1031
    %v1153 = vunpack.c.l.b16 %v1032
    %v1154 = vunpack.c.l.b16 %v1033
    %v1155 = vunpack.c.l.b16 %v1034
    %v1156 = vunpack.c.l.b16 %v1035
    %v1157 = vpack.c.b16 %v1118, %v1117
    %v1158 = vpack.c.b16 %v1120, %v1119
    %v1159 = vpack.c.b16 %v1122, %v1121
    %v1160 = vpack.c.b16 %v1124, %v1123
    %v1161 = vpack.c.b16 %v1126, %v1125
    %v1162 = vpack.c.b16 %v1128, %v1127
    %v1163 = vpack.c.b16 %v1130, %v1129
    %v1164 = vpack.c.b16 %v1132, %v1131
    %v1165 = vpack.c.b16 %v1134, %v1133
    %v1166 = vpack.c.b16 %v1136, %v1135
    %v1167 = vpack.c.b16 %v1138, %v1137
    %v1168 = vpack.c.b16 %v1140, %v1139
    %v1169 = vpack.c.b16 %v1142, %v1141
    %v1170 = vpack.c.b16 %v1144, %v1143
    %v1171 = vpack.c.b16 %v1146, %v1145
    %v1172 = vpack.c.b16 %v1148, %v1147
    %v1173 = vpack.c.b16 %v1150, %v1149
    %v1174 = vpack.c.b16 %v1152, %v1151
    %v1175 = vpack.c.b16 %v1154, %v1153
    %v1176 = vpack.c.b16 %v1156, %v1155
    %v1198 = vsel %vm865, %v1069, 0
    %v1201 = vsel %vm865, %v1072, 0
    %1203 = vmatprep.subr.bf16.mxu0 0
    %1204 = vmatpush1.bf16.msra.mxu0 %v1164
    %1205 = vmatprep.subr.bf16.mxu0 0
    %1206 = vmatpush1.bf16.msra.mxu0 %v1163
    %1207 = vmatprep.subr.bf16.mxu0 0
    %1208 = vmatpush1.bf16.msra.mxu0 %v1162
    %1209 = vmatprep.subr.bf16.mxu0 0
    %1210 = vmatpush1.bf16.msra.mxu0 %v1161
    %1211 = vmatprep.subr.bf16.mxu0 0
    %1212 = vmatpush1.bf16.msra.mxu0 %v1160
    %1213 = vmatprep.subr.bf16.mxu0 0
    %1214 = vmatpush1.bf16.msra.mxu0 %v1159
    %1215 = vmatprep.subr.bf16.mxu0 0
    %1216 = vmatpush1.bf16.msra.mxu0 %v1158
    %1217 = vmatprep.subr.bf16.mxu0 0
    %1218 = vmatpush1.bf16.msra.mxu0 %v1157
    %1219 = vmatprep.subr.bf16.mxu0 0
    %1220 = vmatpush2.bf16.msra.mxu0 %v1172
    %1221 = vmatprep.subr.bf16.mxu0 0
    %1222 = vmatpush2.bf16.msra.mxu0 %v1171
    %1223 = vmatprep.subr.bf16.mxu0 0
    %1224 = vmatpush2.bf16.msra.mxu0 %v1170
    %1225 = vmatprep.subr.bf16.mxu0 0
    %1226 = vmatpush2.bf16.msra.mxu0 %v1169
    %1227 = vmatprep.subr.bf16.mxu0 0
    %1228 = vmatpush2.bf16.msra.mxu0 %v1168
    %1229 = vmatprep.subr.bf16.mxu0 0
    %1230 = vmatpush2.bf16.msra.mxu0 %v1167
    %1231 = vmatprep.subr.bf16.mxu0 0
    %1232 = vmatpush2.bf16.msra.mxu0 %v1166
    %1233 = vmatprep.subr.bf16.mxu0 0
    %1234 = vmatpush2.bf16.msra.mxu0 %v1165
    %1235 = vmatprep.mubr.bf16.mxu0 %v1068
    %1236 = vmatmul.mubr.bf16.gmra.mxu0 %v1067
    %v1237 = vpop.f32.mrf.mxu0
    %v1238 = vadd.f32 %v1049, %v1237
    %v1239 = vpop.f32.mrf.mxu0
    %v1240 = vpop.f32.mrf.mxu0
    %v1241 = vadd.f32 %v1050, %v1240
    %v1242 = vpop.f32.mrf.mxu0
    %1243 = vmatprep.mubr.bf16.mxu0 %v1071
    %1244 = vmatmul.mubr.bf16.gmra.mxu0 %v1070
    %v1245 = vpop.f32.mrf.mxu0
    %v1246 = vadd.f32 %v1051, %v1245
    %v1247 = vpop.f32.mrf.mxu0
    %v1248 = vpop.f32.mrf.mxu0
    %v1249 = vpop.f32.mrf.mxu0
    %1250 = vdwg.mxu0
    %1251 = vmatprep.subr.bf16.mxu0 0
    %1252 = vmatpush1.bf16.msra.mxu0 0
    %1253 = vmatprep.subr.bf16.mxu0 0
    %1254 = vmatpush1.bf16.msra.mxu0 0
    %1255 = vmatprep.subr.bf16.mxu0 0
    %1256 = vmatpush1.bf16.msra.mxu0 0
    %1257 = vmatprep.subr.bf16.mxu0 0
    %1258 = vmatpush1.bf16.msra.mxu0 0
    %1259 = vmatprep.subr.bf16.mxu0 0
    %1260 = vmatpush1.bf16.msra.mxu0 %v1176
    %1261 = vmatprep.subr.bf16.mxu0 0
    %1262 = vmatpush1.bf16.msra.mxu0 %v1175
    %1263 = vmatprep.subr.bf16.mxu0 0
    %1264 = vmatpush1.bf16.msra.mxu0 %v1174
    %1265 = vmatprep.subr.bf16.mxu0 0
    %1266 = vmatpush1.bf16.msra.mxu0 %v1173
    %1267 = vmatprep.subr.bf16.mxu0 0
    %1268 = vmatpush2.bf16.msra.mxu0 0
    %1269 = vmatprep.subr.bf16.mxu0 0
    %1270 = vmatpush2.bf16.msra.mxu0 0
    %1271 = vmatprep.subr.bf16.mxu0 0
    %1272 = vmatpush2.bf16.msra.mxu0 0
    %1273 = vmatprep.subr.bf16.mxu0 0
    %1274 = vmatpush2.bf16.msra.mxu0 0
    %1275 = vmatprep.subr.bf16.mxu0 0
    %1276 = vmatpush2.bf16.msra.mxu0 0
    %1277 = vmatprep.subr.bf16.mxu0 0
    %1278 = vmatpush2.bf16.msra.mxu0 0
    %1279 = vmatprep.subr.bf16.mxu0 0
    %1280 = vmatpush2.bf16.msra.mxu0 0
    %1281 = vmatprep.subr.bf16.mxu0 0
    %1282 = vmatpush2.bf16.msra.mxu0 0
    %1283 = vmatprep.mubr.bf16.mxu0 0
    %1284 = vmatmul.mubr.bf16.gmra.mxu0 %v1198
    %v1285 = vpop.f32.mrf.mxu0
    %v1286 = vadd.f32 %v1238, %v1285
    %v1287 = vpop.f32.mrf.mxu0
    %v1288 = vpop.f32.mrf.mxu0
    %v1289 = vadd.f32 %v1241, %v1288
    %v1290 = vpop.f32.mrf.mxu0
    %1291 = vmatprep.mubr.bf16.mxu0 0
    %1292 = vmatmul.mubr.bf16.gmra.mxu0 %v1201
    %v1293 = vpop.f32.mrf.mxu0
    %v1294 = vadd.f32 %v1246, %v1293
    %v1295 = vpop.f32.mrf.mxu0
    %v1296 = vpop.f32.mrf.mxu0
    %v1297 = vpop.f32.mrf.mxu0
    %1298 = vdwg.mxu0
    %v1299 = vld [vmem:[%s11] sm:$0xff]
    %v1300 = vld [vmem:[%s11 + $0x8] sm:$0xf]
    %v1301 = vld [vmem:[%s11 + $0xc] sm:$0x33]
    %v1302 = vld [vmem:[%s11 + $0x14] sm:$0x3]
    %v1303 = vmul.bf16 %v1299, %v986
    %v1304 = vmul.bf16 %v1300, %v987
    %v1305 = vmul.bf16 %v1301, %v986
    %v1306 = vmul.bf16 %v1302, %v987
    %v1307 = vld [vmem:[%s12] sm:$0xf]
    %v1308 = vld [vmem:[%s12 + $0x4] sm:$0xf]
    %v1309 = vld [vmem:[%s12 + $0x8] sm:$0xf]
    %v1310 = vld [vmem:[%s12 + $0xc] sm:$0xf]
    %v1311 = vld [vmem:[%s12 + $0x10] sm:$0xf]
    %v1312 = vld [vmem:[%s12 + $0x14] sm:$0xf]
    %v1313 = vld [vmem:[%s12 + $0x18] sm:$0xf]
    %v1314 = vld [vmem:[%s12 + $0x1c] sm:$0xf]
    %v1315 = vld [vmem:[%s12 + $0x20] sm:$0xf]
    %v1316 = vld [vmem:[%s12 + $0x24] sm:$0xf]
    %v1317 = vld [vmem:[%s12 + $0x28] sm:$0xf]
    %v1318 = vld [vmem:[%s12 + $0x2c] sm:$0xf]
    %v1319 = vld [vmem:[%s12 + $0x30] sm:$0xf]
    %v1320 = vld [vmem:[%s12 + $0x34] sm:$0xf]
    %v1321 = vld [vmem:[%s12 + $0x38] sm:$0xf]
    %v1322 = vld [vmem:[%s12 + $0x3c] sm:$0xf]
    %v1323 = vld [vmem:[%s12 + $0x40] sm:$0xf]
    %v1324 = vld [vmem:[%s12 + $0x44] sm:$0xf]
    %v1325 = vld [vmem:[%s12 + $0x48] sm:$0xf]
    %v1326 = vld [vmem:[%s12 + $0x4c] sm:$0xf]
    %v1327 = vld [vmem:[%s12 + $0x50] sm:$0xf]
    %v1328 = vld [vmem:[%s12 + $0x54] sm:$0xf]
    %v1329 = vld [vmem:[%s12 + $0x58] sm:$0xf]
    %v1330 = vld [vmem:[%s12 + $0x5c] sm:$0xf]
    %v1331 = vld [vmem:[%s12 + $0x60] sm:$0xf]
    %v1332 = vld [vmem:[%s12 + $0x64] sm:$0xf]
    %v1333 = vld [vmem:[%s12 + $0x68] sm:$0xf]
    %v1334 = vld [vmem:[%s12 + $0x6c] sm:$0xf]
    %v1335 = vld [vmem:[%s12 + $0x70] sm:$0xf]
    %v1336 = vld [vmem:[%s12 + $0x74] sm:$0xf]
    %v1337 = vld [vmem:[%s12 + $0x78] sm:$0xf]
    %v1338 = vld [vmem:[%s12 + $0x7c] sm:$0xf]
    %v1339 = vld [vmem:[%s12 + $0x80] sm:$0xf]
    %v1340 = vld [vmem:[%s12 + $0x84] sm:$0xf]
    %v1341 = vld [vmem:[%s12 + $0x88] sm:$0xf]
    %v1342 = vld [vmem:[%s12 + $0x8c] sm:$0xf]
    %v1343 = vld [vmem:[%s12 + $0x90] sm:$0xf]
    %v1344 = vld [vmem:[%s12 + $0x94] sm:$0xf]
    %v1345 = vld [vmem:[%s12 + $0x98] sm:$0xf]
    %v1346 = vld [vmem:[%s12 + $0x9c] sm:$0xf]
    %v1351 = vunpack.c.l.b16 %v1303
    %v1352 = vunpack.c.h.b16 %v1303
    %v1353 = vunpack.c.l.b16 %v1304
    %v1354 = vunpack.c.l.b16 %v1305
    %v1355 = vunpack.c.h.b16 %v1305
    %v1356 = vunpack.c.l.b16 %v1306
    %v1357 = vpack.c.b16 %v1354, %v1351
    %v1358 = vpack.c.b16 %v1355, %v1352
    %v1359 = vpack.c.b16 %v1356, %v1353
    %v1402 = vunpack.c.l.b16 %v1307
    %v1403 = vunpack.c.l.b16 %v1308
    %v1404 = vunpack.c.l.b16 %v1309
    %v1405 = vunpack.c.l.b16 %v1310
    %v1406 = vunpack.c.l.b16 %v1311
    %v1407 = vunpack.c.l.b16 %v1312
    %v1408 = vunpack.c.l.b16 %v1313
    %v1409 = vunpack.c.l.b16 %v1314
    %v1410 = vunpack.c.l.b16 %v1315
    %v1411 = vunpack.c.l.b16 %v1316
    %v1412 = vunpack.c.l.b16 %v1317
    %v1413 = vunpack.c.l.b16 %v1318
    %v1414 = vunpack.c.l.b16 %v1319
    %v1415 = vunpack.c.l.b16 %v1320
    %v1416 = vunpack.c.l.b16 %v1321
    %v1417 = vunpack.c.l.b16 %v1322
    %v1418 = vunpack.c.l.b16 %v1323
    %v1419 = vunpack.c.l.b16 %v1324
    %v1420 = vunpack.c.l.b16 %v1325
    %v1421 = vunpack.c.l.b16 %v1326
    %v1422 = vunpack.c.l.b16 %v1327
    %v1423 = vunpack.c.l.b16 %v1328
    %v1424 = vunpack.c.l.b16 %v1329
    %v1425 = vunpack.c.l.b16 %v1330
    %v1426 = vunpack.c.l.b16 %v1331
    %v1427 = vunpack.c.l.b16 %v1332
    %v1428 = vunpack.c.l.b16 %v1333
    %v1429 = vunpack.c.l.b16 %v1334
    %v1430 = vunpack.c.l.b16 %v1335
    %v1431 = vunpack.c.l.b16 %v1336
    %v1432 = vunpack.c.l.b16 %v1337
    %v1433 = vunpack.c.l.b16 %v1338
    %v1434 = vunpack.c.l.b16 %v1339
    %v1435 = vunpack.c.l.b16 %v1340
    %v1436 = vunpack.c.l.b16 %v1341
    %v1437 = vunpack.c.l.b16 %v1342
    %v1438 = vunpack.c.l.b16 %v1343
    %v1439 = vunpack.c.l.b16 %v1344
    %v1440 = vunpack.c.l.b16 %v1345
    %v1441 = vunpack.c.l.b16 %v1346
    %v1442 = vpack.c.b16 %v1403, %v1402
    %v1443 = vpack.c.b16 %v1405, %v1404
    %v1444 = vpack.c.b16 %v1407, %v1406
    %v1445 = vpack.c.b16 %v1409, %v1408
    %v1446 = vpack.c.b16 %v1411, %v1410
    %v1447 = vpack.c.b16 %v1413, %v1412
    %v1448 = vpack.c.b16 %v1415, %v1414
    %v1449 = vpack.c.b16 %v1417, %v1416
    %v1450 = vpack.c.b16 %v1419, %v1418
    %v1451 = vpack.c.b16 %v1421, %v1420
    %v1452 = vpack.c.b16 %v1423, %v1422
    %v1453 = vpack.c.b16 %v1425, %v1424
    %v1454 = vpack.c.b16 %v1427, %v1426
    %v1455 = vpack.c.b16 %v1429, %v1428
    %v1456 = vpack.c.b16 %v1431, %v1430
    %v1457 = vpack.c.b16 %v1433, %v1432
    %v1458 = vpack.c.b16 %v1435, %v1434
    %v1459 = vpack.c.b16 %v1437, %v1436
    %v1460 = vpack.c.b16 %v1439, %v1438
    %v1461 = vpack.c.b16 %v1441, %v1440
    %v1483 = vsel %vm865, %v1359, 0
    %1485 = vmatprep.subr.bf16.mxu0 0
    %1486 = vmatpush1.bf16.msra.mxu0 %v1449
    %1487 = vmatprep.subr.bf16.mxu0 0
    %1488 = vmatpush1.bf16.msra.mxu0 %v1448
    %1489 = vmatprep.subr.bf16.mxu0 0
    %1490 = vmatpush1.bf16.msra.mxu0 %v1447
    %1491 = vmatprep.subr.bf16.mxu0 0
    %1492 = vmatpush1.bf16.msra.mxu0 %v1446
    %1493 = vmatprep.subr.bf16.mxu0 0
    %1494 = vmatpush1.bf16.msra.mxu0 %v1445
    %1495 = vmatprep.subr.bf16.mxu0 0
    %1496 = vmatpush1.bf16.msra.mxu0 %v1444
    %1497 = vmatprep.subr.bf16.mxu0 0
    %1498 = vmatpush1.bf16.msra.mxu0 %v1443
    %1499 = vmatprep.subr.bf16.mxu0 0
    %1500 = vmatpush1.bf16.msra.mxu0 %v1442
    %1501 = vmatprep.subr.bf16.mxu0 0
    %1502 = vmatpush2.bf16.msra.mxu0 %v1457
    %1503 = vmatprep.subr.bf16.mxu0 0
    %1504 = vmatpush2.bf16.msra.mxu0 %v1456
    %1505 = vmatprep.subr.bf16.mxu0 0
    %1506 = vmatpush2.bf16.msra.mxu0 %v1455
    %1507 = vmatprep.subr.bf16.mxu0 0
    %1508 = vmatpush2.bf16.msra.mxu0 %v1454
    %1509 = vmatprep.subr.bf16.mxu0 0
    %1510 = vmatpush2.bf16.msra.mxu0 %v1453
    %1511 = vmatprep.subr.bf16.mxu0 0
    %1512 = vmatpush2.bf16.msra.mxu0 %v1452
    %1513 = vmatprep.subr.bf16.mxu0 0
    %1514 = vmatpush2.bf16.msra.mxu0 %v1451
    %1515 = vmatprep.subr.bf16.mxu0 0
    %1516 = vmatpush2.bf16.msra.mxu0 %v1450
    %1517 = vmatprep.mubr.bf16.mxu0 %v1358
    %1518 = vmatmul.mubr.bf16.gmra.mxu0 %v1357
    %v1519 = vpop.f32.mrf.mxu0
    %v1520 = vadd.f32 0.0, %v1519
    %v1521 = vpop.f32.mrf.mxu0
    %v1522 = vpop.f32.mrf.mxu0
    %v1523 = vadd.f32 0.0, %v1522
    %v1524 = vpop.f32.mrf.mxu0
    %1525 = vdwg.mxu0
    %1526 = vmatprep.subr.bf16.mxu0 0
    %1527 = vmatpush1.bf16.msra.mxu0 0
    %1528 = vmatprep.subr.bf16.mxu0 0
    %1529 = vmatpush1.bf16.msra.mxu0 0
    %1530 = vmatprep.subr.bf16.mxu0 0
    %1531 = vmatpush1.bf16.msra.mxu0 0
    %1532 = vmatprep.subr.bf16.mxu0 0
    %1533 = vmatpush1.bf16.msra.mxu0 0
    %1534 = vmatprep.subr.bf16.mxu0 0
    %1535 = vmatpush1.bf16.msra.mxu0 %v1461
    %1536 = vmatprep.subr.bf16.mxu0 0
    %1537 = vmatpush1.bf16.msra.mxu0 %v1460
    %1538 = vmatprep.subr.bf16.mxu0 0
    %1539 = vmatpush1.bf16.msra.mxu0 %v1459
    %1540 = vmatprep.subr.bf16.mxu0 0
    %1541 = vmatpush1.bf16.msra.mxu0 %v1458
    %1542 = vmatprep.subr.bf16.mxu0 0
    %1543 = vmatpush2.bf16.msra.mxu0 0
    %1544 = vmatprep.subr.bf16.mxu0 0
    %1545 = vmatpush2.bf16.msra.mxu0 0
    %1546 = vmatprep.subr.bf16.mxu0 0
    %1547 = vmatpush2.bf16.msra.mxu0 0
    %1548 = vmatprep.subr.bf16.mxu0 0
    %1549 = vmatpush2.bf16.msra.mxu0 0
    %1550 = vmatprep.subr.bf16.mxu0 0
    %1551 = vmatpush2.bf16.msra.mxu0 0
    %1552 = vmatprep.subr.bf16.mxu0 0
    %1553 = vmatpush2.bf16.msra.mxu0 0
    %1554 = vmatprep.subr.bf16.mxu0 0
    %1555 = vmatpush2.bf16.msra.mxu0 0
    %1556 = vmatprep.subr.bf16.mxu0 0
    %1557 = vmatpush2.bf16.msra.mxu0 0
    %1558 = vmatprep.mubr.bf16.mxu0 0
    %1559 = vmatmul.mubr.bf16.gmra.mxu0 %v1483
    %v1560 = vpop.f32.mrf.mxu0
    %v1561 = vadd.f32 %v1520, %v1560
    %v1562 = vpop.f32.mrf.mxu0
    %v1563 = vpop.f32.mrf.mxu0
    %v1564 = vadd.f32 %v1523, %v1563
    %v1565 = vpop.f32.mrf.mxu0
    %1566 = vdwg.mxu0
    %v1567 = vld [vmem:[%s1] sm:$0xff]
    %v1568 = vld [vmem:[%s1 + $0x8] sm:$0xff]
    %v1569 = vld [vmem:[%s1 + $0x10] sm:$0xff]
    %v1570 = vld [vmem:[%s1 + $0x18] sm:$0xff]
    %v1571 = vld [vmem:[%s1 + $0x20] sm:$0xff]
    %v1572 = vld [vmem:[%s1 + $0x28] sm:$0xff]
    %v1573 = vld [vmem:[%s1 + $0x30] sm:$0xff]
    %v1574 = vpack.c.bf16 %v1567, %v1567
    %v1575 = vpack.c.bf16 %v1568, %v1568
    %v1576 = vpack.c.bf16 %v1569, %v1569
    %v1577 = vpack.c.bf16 %v1570, %v1570
    %v1578 = vpack.c.bf16 %v1571, %v1571
    %v1579 = vpack.c.bf16 %v1572, %v1572
    %v1580 = vpack.c.bf16 %v1573, %v1573
    %v1581 = vld [vmem:[%s2] sm:$0xf]
    %v1582 = vld [vmem:[%s2 + $0x4] sm:$0xf]
    %v1583 = vld [vmem:[%s2 + $0x8] sm:$0xf]
    %v1584 = vld [vmem:[%s2 + $0xc] sm:$0xf]
    %v1585 = vld [vmem:[%s2 + $0x10] sm:$0xf]
    %v1586 = vld [vmem:[%s2 + $0x14] sm:$0xf]
    %v1587 = vld [vmem:[%s2 + $0x18] sm:$0xf]
    %v1588 = vld [vmem:[%s2 + $0x1c] sm:$0xf]
    %v1589 = vld [vmem:[%s2 + $0x20] sm:$0xf]
    %v1590 = vld [vmem:[%s2 + $0x24] sm:$0xf]
    %v1591 = vld [vmem:[%s2 + $0x28] sm:$0xf]
    %v1592 = vld [vmem:[%s2 + $0x2c] sm:$0xf]
    %v1593 = vld [vmem:[%s2 + $0x30] sm:$0xf]
    %v1594 = vld [vmem:[%s2 + $0x34] sm:$0xf]
    %v1595 = vld [vmem:[%s2 + $0x38] sm:$0xf]
    %v1596 = vld [vmem:[%s2 + $0x3c] sm:$0xf]
    %v1597 = vld [vmem:[%s2 + $0x40] sm:$0xf]
    %v1598 = vld [vmem:[%s2 + $0x44] sm:$0xf]
    %v1599 = vld [vmem:[%s2 + $0x48] sm:$0xf]
    %v1600 = vld [vmem:[%s2 + $0x4c] sm:$0xf]
    %v1601 = vld [vmem:[%s2 + $0x50] sm:$0xf]
    %v1602 = vld [vmem:[%s2 + $0x54] sm:$0xf]
    %v1603 = vld [vmem:[%s2 + $0x58] sm:$0xf]
    %v1604 = vld [vmem:[%s2 + $0x5c] sm:$0xf]
    %v1605 = vld [vmem:[%s2 + $0x60] sm:$0xf]
    %v1606 = vld [vmem:[%s2 + $0x64] sm:$0xf]
    %v1607 = vld [vmem:[%s2 + $0x68] sm:$0xf]
    %v1608 = vld [vmem:[%s2 + $0x6c] sm:$0xf]
    %v1609 = vld [vmem:[%s2 + $0x70] sm:$0xf]
    %v1610 = vld [vmem:[%s2 + $0x74] sm:$0xf]
    %v1611 = vld [vmem:[%s2 + $0x78] sm:$0xf]
    %v1612 = vld [vmem:[%s2 + $0x7c] sm:$0xf]
    %v1613 = vld [vmem:[%s2 + $0x80] sm:$0xf]
    %v1614 = vld [vmem:[%s2 + $0x84] sm:$0xf]
    %v1615 = vld [vmem:[%s2 + $0x88] sm:$0xf]
    %v1616 = vld [vmem:[%s2 + $0x8c] sm:$0xf]
    %v1617 = vld [vmem:[%s2 + $0x90] sm:$0xf]
    %v1618 = vld [vmem:[%s2 + $0x94] sm:$0xf]
    %v1619 = vld [vmem:[%s2 + $0x98] sm:$0xf]
    %v1620 = vld [vmem:[%s2 + $0x9c] sm:$0xf]
    %v1621 = vld [vmem:[%s2 + $0xa0] sm:$0xf]
    %v1622 = vld [vmem:[%s2 + $0xa4] sm:$0xf]
    %v1623 = vld [vmem:[%s2 + $0xa8] sm:$0xf]
    %v1624 = vld [vmem:[%s2 + $0xac] sm:$0xf]
    %v1625 = vld [vmem:[%s2 + $0xb0] sm:$0xf]
    %v1626 = vld [vmem:[%s2 + $0xb4] sm:$0xf]
    %v1627 = vld [vmem:[%s2 + $0xb8] sm:$0xf]
    %v1628 = vld [vmem:[%s2 + $0xbc] sm:$0xf]
    %v1629 = vld [vmem:[%s2 + $0xc0] sm:$0xf]
    %v1630 = vld [vmem:[%s2 + $0xc4] sm:$0xf]
    %v1631 = vld [vmem:[%s2 + $0xc8] sm:$0xf]
    %v1632 = vld [vmem:[%s2 + $0xcc] sm:$0xf]
    %v1633 = vld [vmem:[%s2 + $0xd0] sm:$0xf]
    %v1634 = vld [vmem:[%s2 + $0xd4] sm:$0xf]
    %v1635 = vld [vmem:[%s2 + $0xd8] sm:$0xf]
    %v1636 = vld [vmem:[%s2 + $0xdc] sm:$0xf]
    %v1637 = vld [vmem:[%s2 + $0xe0] sm:$0xf]
    %v1638 = vld [vmem:[%s2 + $0xe4] sm:$0xf]
    %v1639 = vld [vmem:[%s2 + $0xe8] sm:$0xf]
    %v1640 = vld [vmem:[%s2 + $0xec] sm:$0xf]
    %v1641 = vld [vmem:[%s2 + $0xf0] sm:$0xf]
    %v1642 = vld [vmem:[%s2 + $0xf4] sm:$0xf]
    %v1643 = vld [vmem:[%s2 + $0xf8] sm:$0xf]
    %v1644 = vld [vmem:[%s2 + $0xfc] sm:$0xf]
    %v1645 = vld [vmem:[%s2 + $0x100] sm:$0xf]
    %v1646 = vld [vmem:[%s2 + $0x104] sm:$0xf]
    %v1647 = vld [vmem:[%s2 + $0x108] sm:$0xf]
    %v1648 = vld [vmem:[%s2 + $0x10c] sm:$0xf]
    %v1649 = vld [vmem:[%s2 + $0x110] sm:$0xf]
    %v1650 = vld [vmem:[%s2 + $0x114] sm:$0xf]
    %v1651 = vld [vmem:[%s2 + $0x118] sm:$0xf]
    %v1652 = vld [vmem:[%s2 + $0x11c] sm:$0xf]
    %v1653 = vld [vmem:[%s2 + $0x120] sm:$0xf]
    %v1654 = vld [vmem:[%s2 + $0x124] sm:$0xf]
    %v1655 = vld [vmem:[%s2 + $0x128] sm:$0xf]
    %v1656 = vld [vmem:[%s2 + $0x12c] sm:$0xf]
    %v1657 = vld [vmem:[%s2 + $0x130] sm:$0xf]
    %v1658 = vld [vmem:[%s2 + $0x134] sm:$0xf]
    %v1659 = vld [vmem:[%s2 + $0x138] sm:$0xf]
    %v1660 = vld [vmem:[%s2 + $0x13c] sm:$0xf]
    %v1661 = vld [vmem:[%s2 + $0x140] sm:$0xf]
    %v1662 = vld [vmem:[%s2 + $0x144] sm:$0xf]
    %v1663 = vld [vmem:[%s2 + $0x148] sm:$0xf]
    %v1664 = vld [vmem:[%s2 + $0x14c] sm:$0xf]
    %v1665 = vld [vmem:[%s2 + $0x150] sm:$0xf]
    %v1666 = vld [vmem:[%s2 + $0x154] sm:$0xf]
    %v1667 = vld [vmem:[%s2 + $0x158] sm:$0xf]
    %v1668 = vld [vmem:[%s2 + $0x15c] sm:$0xf]
    %v1669 = vld [vmem:[%s2 + $0x160] sm:$0xf]
    %v1670 = vld [vmem:[%s2 + $0x164] sm:$0xf]
    %v1671 = vld [vmem:[%s2 + $0x168] sm:$0xf]
    %v1672 = vld [vmem:[%s2 + $0x16c] sm:$0xf]
    %v1673 = vld [vmem:[%s2 + $0x170] sm:$0xf]
    %v1674 = vld [vmem:[%s2 + $0x174] sm:$0xf]
    %v1675 = vld [vmem:[%s2 + $0x178] sm:$0xf]
    %v1676 = vld [vmem:[%s2 + $0x17c] sm:$0xf]
    %v1677 = vld [vmem:[%s2 + $0x180] sm:$0xf]
    %v1678 = vld [vmem:[%s2 + $0x184] sm:$0xf]
    %vm1679 = vcmp.eq.s32.totalorder %v1041, 20
    %v1680 = vsel %vm1679, 1, 0
    %v1681 = vcvt.s32.f32 %v1680
    %v1780 = vunpack.c.l.b16 %v1581
    %v1781 = vunpack.c.l.b16 %v1582
    %v1782 = vunpack.c.l.b16 %v1583
    %v1783 = vunpack.c.l.b16 %v1584
    %v1784 = vunpack.c.l.b16 %v1585
    %v1785 = vunpack.c.l.b16 %v1586
    %v1786 = vunpack.c.l.b16 %v1587
    %v1787 = vunpack.c.l.b16 %v1588
    %v1788 = vunpack.c.l.b16 %v1589
    %v1789 = vunpack.c.l.b16 %v1590
    %v1790 = vunpack.c.l.b16 %v1591
    %v1791 = vunpack.c.l.b16 %v1592
    %v1792 = vunpack.c.l.b16 %v1593
    %v1793 = vunpack.c.l.b16 %v1594
    %v1794 = vunpack.c.l.b16 %v1595
    %v1795 = vunpack.c.l.b16 %v1596
    %v1796 = vunpack.c.l.b16 %v1597
    %v1797 = vunpack.c.l.b16 %v1598
    %v1798 = vunpack.c.l.b16 %v1599
    %v1799 = vunpack.c.l.b16 %v1600
    %v1800 = vunpack.c.l.b16 %v1601
    %v1801 = vunpack.c.l.b16 %v1602
    %v1802 = vunpack.c.l.b16 %v1603
    %v1803 = vunpack.c.l.b16 %v1604
    %v1804 = vunpack.c.l.b16 %v1605
    %v1805 = vunpack.c.l.b16 %v1606
    %v1806 = vunpack.c.l.b16 %v1607
    %v1807 = vunpack.c.l.b16 %v1608
    %v1808 = vunpack.c.l.b16 %v1609
    %v1809 = vunpack.c.l.b16 %v1610
    %v1810 = vunpack.c.l.b16 %v1611
    %v1811 = vunpack.c.l.b16 %v1612
    %v1812 = vunpack.c.l.b16 %v1613
    %v1813 = vunpack.c.l.b16 %v1614
    %v1814 = vunpack.c.l.b16 %v1615
    %v1815 = vunpack.c.l.b16 %v1616
    %v1816 = vunpack.c.l.b16 %v1617
    %v1817 = vunpack.c.l.b16 %v1618
    %v1818 = vunpack.c.l.b16 %v1619
    %v1819 = vunpack.c.l.b16 %v1620
    %v1820 = vunpack.c.l.b16 %v1621
    %v1821 = vunpack.c.l.b16 %v1622
    %v1822 = vunpack.c.l.b16 %v1623
    %v1823 = vunpack.c.l.b16 %v1624
    %v1824 = vunpack.c.l.b16 %v1625
    %v1825 = vunpack.c.l.b16 %v1626
    %v1826 = vunpack.c.l.b16 %v1627
    %v1827 = vunpack.c.l.b16 %v1628
    %v1828 = vunpack.c.l.b16 %v1629
    %v1829 = vunpack.c.l.b16 %v1630
    %v1830 = vunpack.c.l.b16 %v1631
    %v1831 = vunpack.c.l.b16 %v1632
    %v1832 = vunpack.c.l.b16 %v1633
    %v1833 = vunpack.c.l.b16 %v1634
    %v1834 = vunpack.c.l.b16 %v1635
    %v1835 = vunpack.c.l.b16 %v1636
    %v1836 = vunpack.c.l.b16 %v1637
    %v1837 = vunpack.c.l.b16 %v1638
    %v1838 = vunpack.c.l.b16 %v1639
    %v1839 = vunpack.c.l.b16 %v1640
    %v1840 = vunpack.c.l.b16 %v1641
    %v1841 = vunpack.c.l.b16 %v1642
    %v1842 = vunpack.c.l.b16 %v1643
    %v1843 = vunpack.c.l.b16 %v1644
    %v1844 = vunpack.c.l.b16 %v1645
    %v1845 = vunpack.c.l.b16 %v1646
    %v1846 = vunpack.c.l.b16 %v1647
    %v1847 = vunpack.c.l.b16 %v1648
    %v1848 = vunpack.c.l.b16 %v1649
    %v1849 = vunpack.c.l.b16 %v1650
    %v1850 = vunpack.c.l.b16 %v1651
    %v1851 = vunpack.c.l.b16 %v1652
    %v1852 = vunpack.c.l.b16 %v1653
    %v1853 = vunpack.c.l.b16 %v1654
    %v1854 = vunpack.c.l.b16 %v1655
    %v1855 = vunpack.c.l.b16 %v1656
    %v1856 = vunpack.c.l.b16 %v1657
    %v1857 = vunpack.c.l.b16 %v1658
    %v1858 = vunpack.c.l.b16 %v1659
    %v1859 = vunpack.c.l.b16 %v1660
    %v1860 = vunpack.c.l.b16 %v1661
    %v1861 = vunpack.c.l.b16 %v1662
    %v1862 = vunpack.c.l.b16 %v1663
    %v1863 = vunpack.c.l.b16 %v1664
    %v1864 = vunpack.c.l.b16 %v1665
    %v1865 = vunpack.c.l.b16 %v1666
    %v1866 = vunpack.c.l.b16 %v1667
    %v1867 = vunpack.c.l.b16 %v1668
    %v1868 = vunpack.c.l.b16 %v1669
    %v1869 = vunpack.c.l.b16 %v1670
    %v1870 = vunpack.c.l.b16 %v1671
    %v1871 = vunpack.c.l.b16 %v1672
    %v1872 = vunpack.c.l.b16 %v1673
    %v1873 = vunpack.c.l.b16 %v1674
    %v1874 = vunpack.c.l.b16 %v1675
    %v1875 = vunpack.c.l.b16 %v1676
    %v1876 = vunpack.c.l.b16 %v1677
    %v1877 = vunpack.c.l.b16 %v1678
    %v1878 = vpack.c.b16 %v1781, %v1780
    %v1879 = vpack.c.b16 %v1783, %v1782
    %v1880 = vpack.c.b16 %v1785, %v1784
    %v1881 = vpack.c.b16 %v1787, %v1786
    %v1882 = vpack.c.b16 %v1789, %v1788
    %v1883 = vpack.c.b16 %v1791, %v1790
    %v1884 = vpack.c.b16 %v1793, %v1792
    %v1885 = vpack.c.b16 %v1795, %v1794
    %v1886 = vpack.c.b16 %v1797, %v1796
    %v1887 = vpack.c.b16 %v1799, %v1798
    %v1888 = vpack.c.b16 %v1801, %v1800
    %v1889 = vpack.c.b16 %v1803, %v1802
    %v1890 = vpack.c.b16 %v1805, %v1804
    %v1891 = vpack.c.b16 %v1807, %v1806
    %v1892 = vpack.c.b16 %v1809, %v1808
    %v1893 = vpack.c.b16 %v1811, %v1810
    %v1894 = vpack.c.b16 %v1813, %v1812
    %v1895 = vpack.c.b16 %v1815, %v1814
    %v1896 = vpack.c.b16 %v1817, %v1816
    %v1897 = vpack.c.b16 %v1819, %v1818
    %v1898 = vpack.c.b16 %v1821, %v1820
    %v1899 = vpack.c.b16 %v1823, %v1822
    %v1900 = vpack.c.b16 %v1825, %v1824
    %v1901 = vpack.c.b16 %v1827, %v1826
    %v1902 = vpack.c.b16 %v1829, %v1828
    %v1903 = vpack.c.b16 %v1831, %v1830
    %v1904 = vpack.c.b16 %v1833, %v1832
    %v1905 = vpack.c.b16 %v1835, %v1834
    %v1906 = vpack.c.b16 %v1837, %v1836
    %v1907 = vpack.c.b16 %v1839, %v1838
    %v1908 = vpack.c.b16 %v1841, %v1840
    %v1909 = vpack.c.b16 %v1843, %v1842
    %v1910 = vpack.c.b16 %v1845, %v1844
    %v1911 = vpack.c.b16 %v1847, %v1846
    %v1912 = vpack.c.b16 %v1849, %v1848
    %v1913 = vpack.c.b16 %v1851, %v1850
    %v1914 = vpack.c.b16 %v1853, %v1852
    %v1915 = vpack.c.b16 %v1855, %v1854
    %v1916 = vpack.c.b16 %v1857, %v1856
    %v1917 = vpack.c.b16 %v1859, %v1858
    %v1918 = vpack.c.b16 %v1861, %v1860
    %v1919 = vpack.c.b16 %v1863, %v1862
    %v1920 = vpack.c.b16 %v1865, %v1864
    %v1921 = vpack.c.b16 %v1867, %v1866
    %v1922 = vpack.c.b16 %v1869, %v1868
    %v1923 = vpack.c.b16 %v1871, %v1870
    %v1924 = vpack.c.b16 %v1873, %v1872
    %v1925 = vpack.c.b16 %v1875, %v1874
    %v1926 = vpack.c.b16 %v1877, %v1876
    %v1977 = vsel %vm495, %v1580, 0
    %1979 = vmatprep.subr.bf16.mxu0 0
    %1980 = vmatpush1.bf16.msra.mxu0 %v1885
    %1981 = vmatprep.subr.bf16.mxu0 0
    %1982 = vmatpush1.bf16.msra.mxu0 %v1884
    %1983 = vmatprep.subr.bf16.mxu0 0
    %1984 = vmatpush1.bf16.msra.mxu0 %v1883
    %1985 = vmatprep.subr.bf16.mxu0 0
    %1986 = vmatpush1.bf16.msra.mxu0 %v1882
    %1987 = vmatprep.subr.bf16.mxu0 0
    %1988 = vmatpush1.bf16.msra.mxu0 %v1881
    %1989 = vmatprep.subr.bf16.mxu0 0
    %1990 = vmatpush1.bf16.msra.mxu0 %v1880
    %1991 = vmatprep.subr.bf16.mxu0 0
    %1992 = vmatpush1.bf16.msra.mxu0 %v1879
    %1993 = vmatprep.subr.bf16.mxu0 0
    %1994 = vmatpush1.bf16.msra.mxu0 %v1878
    %1995 = vmatprep.subr.bf16.mxu0 0
    %1996 = vmatpush2.bf16.msra.mxu0 %v1893
    %1997 = vmatprep.subr.bf16.mxu0 0
    %1998 = vmatpush2.bf16.msra.mxu0 %v1892
    %1999 = vmatprep.subr.bf16.mxu0 0
    %2000 = vmatpush2.bf16.msra.mxu0 %v1891
    %2001 = vmatprep.subr.bf16.mxu0 0
    %2002 = vmatpush2.bf16.msra.mxu0 %v1890
    %2003 = vmatprep.subr.bf16.mxu0 0
    %2004 = vmatpush2.bf16.msra.mxu0 %v1889
    %2005 = vmatprep.subr.bf16.mxu0 0
    %2006 = vmatpush2.bf16.msra.mxu0 %v1888
    %2007 = vmatprep.subr.bf16.mxu0 0
    %2008 = vmatpush2.bf16.msra.mxu0 %v1887
    %2009 = vmatprep.subr.bf16.mxu0 0
    %2010 = vmatpush2.bf16.msra.mxu0 %v1886
    %2011 = vmatprep.mubr.bf16.mxu0 %v1575
    %2012 = vmatmul.mubr.bf16.gmra.mxu0 %v1574
    %v2013 = vpop.f32.mrf.mxu0
    %v2014 = vadd.f32 %v1681, %v2013
    %v2015 = vpop.f32.mrf.mxu0
    %v2016 = vpop.f32.mrf.mxu0
    %v2017 = vpop.f32.mrf.mxu0
    %2018 = vdwg.mxu0
    %2019 = vmatprep.subr.bf16.mxu0 0
    %2020 = vmatpush1.bf16.msra.mxu0 %v1901
    %2021 = vmatprep.subr.bf16.mxu0 0
    %2022 = vmatpush1.bf16.msra.mxu0 %v1900
    %2023 = vmatprep.subr.bf16.mxu0 0
    %2024 = vmatpush1.bf16.msra.mxu0 %v1899
    %2025 = vmatprep.subr.bf16.mxu0 0
    %2026 = vmatpush1.bf16.msra.mxu0 %v1898
    %2027 = vmatprep.subr.bf16.mxu0 0
    %2028 = vmatpush1.bf16.msra.mxu0 %v1897
    %2029 = vmatprep.subr.bf16.mxu0 0
    %2030 = vmatpush1.bf16.msra.mxu0 %v1896
    %2031 = vmatprep.subr.bf16.mxu0 0
    %2032 = vmatpush1.bf16.msra.mxu0 %v1895
    %2033 = vmatprep.subr.bf16.mxu0 0
    %2034 = vmatpush1.bf16.msra.mxu0 %v1894
    %2035 = vmatprep.subr.bf16.mxu0 0
    %2036 = vmatpush2.bf16.msra.mxu0 %v1909
    %2037 = vmatprep.subr.bf16.mxu0 0
    %2038 = vmatpush2.bf16.msra.mxu0 %v1908
    %2039 = vmatprep.subr.bf16.mxu0 0
    %2040 = vmatpush2.bf16.msra.mxu0 %v1907
    %2041 = vmatprep.subr.bf16.mxu0 0
    %2042 = vmatpush2.bf16.msra.mxu0 %v1906
    %2043 = vmatprep.subr.bf16.mxu0 0
    %2044 = vmatpush2.bf16.msra.mxu0 %v1905
    %2045 = vmatprep.subr.bf16.mxu0 0
    %2046 = vmatpush2.bf16.msra.mxu0 %v1904
    %2047 = vmatprep.subr.bf16.mxu0 0
    %2048 = vmatpush2.bf16.msra.mxu0 %v1903
    %2049 = vmatprep.subr.bf16.mxu0 0
    %2050 = vmatpush2.bf16.msra.mxu0 %v1902
    %2051 = vmatprep.mubr.bf16.mxu0 %v1577
    %2052 = vmatmul.mubr.bf16.gmra.mxu0 %v1576
    %v2053 = vpop.f32.mrf.mxu0
    %v2054 = vadd.f32 %v2014, %v2053
    %v2055 = vpop.f32.mrf.mxu0
    %v2056 = vpop.f32.mrf.mxu0
    %v2057 = vpop.f32.mrf.mxu0
    %2058 = vdwg.mxu0
    %2059 = vmatprep.subr.bf16.mxu0 0
    %2060 = vmatpush1.bf16.msra.mxu0 %v1917
    %2061 = vmatprep.subr.bf16.mxu0 0
    %2062 = vmatpush1.bf16.msra.mxu0 %v1916
    %2063 = vmatprep.subr.bf16.mxu0 0
    %2064 = vmatpush1.bf16.msra.mxu0 %v1915
    %2065 = vmatprep.subr.bf16.mxu0 0
    %2066 = vmatpush1.bf16.msra.mxu0 %v1914
    %2067 = vmatprep.subr.bf16.mxu0 0
    %2068 = vmatpush1.bf16.msra.mxu0 %v1913
    %2069 = vmatprep.subr.bf16.mxu0 0
    %2070 = vmatpush1.bf16.msra.mxu0 %v1912
    %2071 = vmatprep.subr.bf16.mxu0 0
    %2072 = vmatpush1.bf16.msra.mxu0 %v1911
    %2073 = vmatprep.subr.bf16.mxu0 0
    %2074 = vmatpush1.bf16.msra.mxu0 %v1910
    %2075 = vmatprep.subr.bf16.mxu0 0
    %2076 = vmatpush2.bf16.msra.mxu0 %v1925
    %2077 = vmatprep.subr.bf16.mxu0 0
    %2078 = vmatpush2.bf16.msra.mxu0 %v1924
    %2079 = vmatprep.subr.bf16.mxu0 0
    %2080 = vmatpush2.bf16.msra.mxu0 %v1923
    %2081 = vmatprep.subr.bf16.mxu0 0
    %2082 = vmatpush2.bf16.msra.mxu0 %v1922
    %2083 = vmatprep.subr.bf16.mxu0 0
    %2084 = vmatpush2.bf16.msra.mxu0 %v1921
    %2085 = vmatprep.subr.bf16.mxu0 0
    %2086 = vmatpush2.bf16.msra.mxu0 %v1920
    %2087 = vmatprep.subr.bf16.mxu0 0
    %2088 = vmatpush2.bf16.msra.mxu0 %v1919
    %2089 = vmatprep.subr.bf16.mxu0 0
    %2090 = vmatpush2.bf16.msra.mxu0 %v1918
    %2091 = vmatprep.mubr.bf16.mxu0 %v1579
    %2092 = vmatmul.mubr.bf16.gmra.mxu0 %v1578
    %v2093 = vpop.f32.mrf.mxu0
    %v2094 = vadd.f32 %v2054, %v2093
    %v2095 = vpop.f32.mrf.mxu0
    %v2096 = vpop.f32.mrf.mxu0
    %v2097 = vpop.f32.mrf.mxu0
    %2098 = vdwg.mxu0
    %2099 = vmatprep.subr.bf16.mxu0 0
    %2100 = vmatpush1.bf16.msra.mxu0 0
    %2101 = vmatprep.subr.bf16.mxu0 0
    %2102 = vmatpush1.bf16.msra.mxu0 0
    %2103 = vmatprep.subr.bf16.mxu0 0
    %2104 = vmatpush1.bf16.msra.mxu0 0
    %2105 = vmatprep.subr.bf16.mxu0 0
    %2106 = vmatpush1.bf16.msra.mxu0 0
    %2107 = vmatprep.subr.bf16.mxu0 0
    %2108 = vmatpush1.bf16.msra.mxu0 0
    %2109 = vmatprep.subr.bf16.mxu0 0
    %2110 = vmatpush1.bf16.msra.mxu0 0
    %2111 = vmatprep.subr.bf16.mxu0 0
    %2112 = vmatpush1.bf16.msra.mxu0 0
    %2113 = vmatprep.subr.bf16.mxu0 0
    %2114 = vmatpush1.bf16.msra.mxu0 %v1926
    %2115 = vmatprep.subr.bf16.mxu0 0
    %2116 = vmatpush2.bf16.msra.mxu0 0
    %2117 = vmatprep.subr.bf16.mxu0 0
    %2118 = vmatpush2.bf16.msra.mxu0 0
    %2119 = vmatprep.subr.bf16.mxu0 0
    %2120 = vmatpush2.bf16.msra.mxu0 0
    %2121 = vmatprep.subr.bf16.mxu0 0
    %2122 = vmatpush2.bf16.msra.mxu0 0
    %2123 = vmatprep.subr.bf16.mxu0 0
    %2124 = vmatpush2.bf16.msra.mxu0 0
    %2125 = vmatprep.subr.bf16.mxu0 0
    %2126 = vmatpush2.bf16.msra.mxu0 0
    %2127 = vmatprep.subr.bf16.mxu0 0
    %2128 = vmatpush2.bf16.msra.mxu0 0
    %2129 = vmatprep.subr.bf16.mxu0 0
    %2130 = vmatpush2.bf16.msra.mxu0 0
    %2131 = vmatprep.mubr.bf16.mxu0 0
    %2132 = vmatmul.mubr.bf16.gmra.mxu0 %v1977
    %v2133 = vpop.f32.mrf.mxu0
    %v2134 = vadd.f32 %v2094, %v2133
    %v2135 = vpop.f32.mrf.mxu0
    %v2136 = vpop.f32.mrf.mxu0
    %v2137 = vpop.f32.mrf.mxu0
    %2138 = vdwg.mxu0
    %v2139 = vpack.c.bf16 %v2134, %v2134
    %v2140 = vpack.c.bf16 %v1289, %v1286
    %v2141 = vpack.c.bf16 %v1294, %v1294
    %vm2142 = vcmask 171008
    %v2144 = vsel %vm2142, %v2139, 0
    %vm2146 = vcmask 1041408
    %vm2147 = vcmask 1042432
    %v2148 = vsel %vm2146, 4294967295, 65535
    %v2149 = vsel %vm2147, %v2148, 0
    %v2151 = vand.u32 %v2141, %v2149
    %2153 = vmatprep.subr.bf16.mxu0 0
    %2154 = vmatpush1.bf16.msra.mxu0 0
    %2155 = vmatprep.subr.bf16.mxu0 0
    %2156 = vmatpush1.bf16.msra.mxu0 0
    %2157 = vmatprep.subr.bf16.mxu0 0
    %2158 = vmatpush1.bf16.msra.mxu0 0
    %2159 = vmatprep.subr.bf16.mxu0 0
    %2160 = vmatpush1.bf16.msra.mxu0 0
    %2161 = vmatprep.subr.bf16.mxu0 0
    %2162 = vmatpush1.bf16.msra.mxu0 0
    %2163 = vmatprep.subr.bf16.mxu0 0
    %2164 = vmatpush1.bf16.msra.mxu0 0
    %2165 = vmatprep.subr.bf16.mxu0 0
    %2166 = vmatpush1.bf16.msra.mxu0 %v2151
    %2167 = vmatprep.subr.bf16.mxu0 0
    %2168 = vmatpush1.bf16.msra.mxu0 %v2140
    %2169 = vmatprep.subr.bf16.mxu0 0
    %2170 = vmatpush2.bf16.msra.mxu0 0
    %2171 = vmatprep.subr.bf16.mxu0 0
    %2172 = vmatpush2.bf16.msra.mxu0 0
    %2173 = vmatprep.subr.bf16.mxu0 0
    %2174 = vmatpush2.bf16.msra.mxu0 0
    %2175 = vmatprep.subr.bf16.mxu0 0
    %2176 = vmatpush2.bf16.msra.mxu0 0
    %2177 = vmatprep.subr.bf16.mxu0 0
    %2178 = vmatpush2.bf16.msra.mxu0 0
    %2179 = vmatprep.subr.bf16.mxu0 0
    %2180 = vmatpush2.bf16.msra.mxu0 0
    %2181 = vmatprep.subr.bf16.mxu0 0
    %2182 = vmatpush2.bf16.msra.mxu0 0
    %2183 = vmatprep.subr.bf16.mxu0 0
    %2184 = vmatpush2.bf16.msra.mxu0 0
    %2185 = vmatprep.mubr.bf16.mxu0 0
    %2186 = vmatmul.mubr.bf16.gmra.mxu0 %v2144
    %v2187 = vpop.f32.mrf.mxu0
    %v2188 = vadd.f32 0.0, %v2187
    %v2189 = vpop.f32.mrf.mxu0
    %v2190 = vpop.f32.mrf.mxu0
    %v2191 = vpop.f32.mrf.mxu0
    %2192 = vdwg.mxu0
    %v2193 = vmax.f32 %v2188, 0.0
    %v2194 = vpack.c.bf16 %v2193, %v2193
    %v2195 = vpack.c.bf16 %v1564, %v1561
    %vm2196 = vcmask 89088
    %v2198 = vsel %vm2196, %v2194, 0
    %vm2200 = vcmask 1044480
    %vm2201 = vcmask 1045504
    %v2202 = vsel %vm2200, 4294967295, 65535
    %v2203 = vsel %vm2201, %v2202, 0
    %v2205 = vand.u32 %v2195, %v2203
    %2207 = vmatprep.subr.bf16.mxu0 0
    %2208 = vmatpush1.bf16.msra.mxu0 0
    %2209 = vmatprep.subr.bf16.mxu0 0
    %2210 = vmatpush1.bf16.msra.mxu0 0
    %2211 = vmatprep.subr.bf16.mxu0 0
    %2212 = vmatpush1.bf16.msra.mxu0 0
    %2213 = vmatprep.subr.bf16.mxu0 0
    %2214 = vmatpush1.bf16.msra.mxu0 0
    %2215 = vmatprep.subr.bf16.mxu0 0
    %2216 = vmatpush1.bf16.msra.mxu0 0
    %2217 = vmatprep.subr.bf16.mxu0 0
    %2218 = vmatpush1.bf16.msra.mxu0 0
    %2219 = vmatprep.subr.bf16.mxu0 0
    %2220 = vmatpush1.bf16.msra.mxu0 0
    %2221 = vmatprep.subr.bf16.mxu0 0
    %2222 = vmatpush1.bf16.msra.mxu0 %v2205
    %2223 = vmatprep.subr.bf16.mxu0 0
    %2224 = vmatpush2.bf16.msra.mxu0 0
    %2225 = vmatprep.subr.bf16.mxu0 0
    %2226 = vmatpush2.bf16.msra.mxu0 0
    %2227 = vmatprep.subr.bf16.mxu0 0
    %2228 = vmatpush2.bf16.msra.mxu0 0
    %2229 = vmatprep.subr.bf16.mxu0 0
    %2230 = vmatpush2.bf16.msra.mxu0 0
    %2231 = vmatprep.subr.bf16.mxu0 0
    %2232 = vmatpush2.bf16.msra.mxu0 0
    %2233 = vmatprep.subr.bf16.mxu0 0
    %2234 = vmatpush2.bf16.msra.mxu0 0
    %2235 = vmatprep.subr.bf16.mxu0 0
    %2236 = vmatpush2.bf16.msra.mxu0 0
    %2237 = vmatprep.subr.bf16.mxu0 0
    %2238 = vmatpush2.bf16.msra.mxu0 0
    %2239 = vmatprep.mubr.bf16.mxu0 0
    %2240 = vmatmul.mubr.bf16.gmra.mxu0 %v2198
    %v2241 = vpop.f32.mrf.mxu0
    %v2242 = vadd.f32 0.0, %v2241
    %v2243 = vpop.f32.mrf.mxu0
    %v2244 = vpop.f32.mrf.mxu0
    %v2245 = vpop.f32.mrf.mxu0
    %2246 = vdwg.mxu0
    %vm2247 = vcmask 80896
    %2248 = vst.msk [vmem:[#allocation2] sm:$0xff] %vm2247, %v2242
    // Predicated region
    $region54: #{_forward.1} parent=1 // pred_check
      _
    $region55: #{_forward.1} parent=1 // pred_check_branch
      %2250 = sbr.rel (0) target = $region57
    $region56: #{_forward.1} parent=1 // pred_region
      %s2252 = ssub.s32 128, 128
      %2253 = vsyncadd [#allocation3], %s2252
      %s2255 = sshll.u32 [#allocation2], 4
      %s2256 = int_to_ptr.vmem [resolvable:$true] %s2255
      %2258 = dma.vmem_to_hbm [thread:$0]  %s2256, 128, %s13, [#allocation3]
    $region57: #{_forward.1} parent=1 // pred_fallthru
      _
    // Predicated region
    $region58: #{_forward.1} parent=1 // pred_check
      _
    $region59: #{_forward.1} parent=1 // pred_check_branch
      %2260 = sbr.rel (0) target = $region61
    $region60: #{_forward.1} parent=1 // pred_region
      %2261 = dma.done [#allocation3], 128
    $region61: #{_forward.1} parent=1 // pred_fallthru
      _
    %2262 = vsyncpa [#allocation3], 1

</llo_original>
